<compile_context>
chip_gen: v5e
topology: v5e:2x2
jax: 0.10.0
libtpu: 0.0.40
codegen_flags: <defaults>
</compile_context>

<pallas_src>
import math
import functools

import jax
import jax.numpy as jnp
from jax.experimental import pallas as pl
from jax.experimental.pallas import tpu as pltpu

NUM_HEADS = 4
LN_EPS = 1e-5
NEG_LARGE = -1e30  # finite "-inf": safe under tiling (no exp(-inf - -inf) NaNs)


def _layernorm(x, gamma, beta):
    mu = jnp.mean(x, axis=-1, keepdims=True)
    var = jnp.mean((x - mu) * (x - mu), axis=-1, keepdims=True)
    return (x - mu) * jax.lax.rsqrt(var + LN_EPS) * gamma + beta


def transformer_block_kernel(
        x_ref,                                    # (1, T, H)  f32  full sequence of batch b
        xq_ref,                                   # (1, tq, H) f32  this query block
        wqh_ref, wkh_ref, wvh_ref,                # (nh, H, dh) bf16 per-head QKV weights
        wph_ref,                                  # (nh, dh, H) bf16 per-head output proj
        w1_ref, b1_ref, w2_ref, b2_ref,           # (H,4H) bf16, (1,4H) f32, (4H,H) bf16, (1,H) f32
        g0_ref, be0_ref, g1_ref, be1_ref,         # (1,H) f32 LayerNorm params
        o_ref,                                    # (1, tq, H) f32
        q_scr, k_scr, v_scr,                      # bf16: (nh,tq,dh), (nh,T,dh), (nh,T,dh)
        m_scr, l_scr, acc_scr,                    # f32:  (nh,tq,1), (nh,tq,1), (nh,tq,dh)
        *, num_heads, block_q):
    T = x_ref.shape[1]
    H = x_ref.shape[2]
    dh = H // num_heads
    tq = block_q
    scale = 1.0 / math.sqrt(dh)
    qi = pl.program_id(1)
    q_start = qi * tq

    # ---- K / V projections: once per batch element, head-major scratch -----
    @pl.when(qi == 0)
    def _():
        x_all = x_ref[0].astype(jnp.bfloat16)                 # (T, H)
        for h in range(num_heads):                            # static unroll; major-dim weight slices
            k_scr[h] = jnp.dot(x_all, wkh_ref[h],
                               preferred_element_type=jnp.float32).astype(jnp.bfloat16)
            v_scr[h] = jnp.dot(x_all, wvh_ref[h],
                               preferred_element_type=jnp.float32).astype(jnp.bfloat16)

    # ---- Q projection for this query block (scale folded into q) -----------
    xq = xq_ref[0]                                            # (tq, H) f32 (kept for residual)
    xq_bf = xq.astype(jnp.bfloat16)
    for h in range(num_heads):
        qh = jnp.dot(xq_bf, wqh_ref[h], preferred_element_type=jnp.float32)
        q_scr[h] = (qh * scale).astype(jnp.bfloat16)
    q_hm = q_scr[...]                                         # (nh, tq, dh) bf16

    # ---- flash-style online softmax over causal key blocks -----------------
    m_scr[...] = jnp.full_like(m_scr, NEG_LARGE)
    l_scr[...] = jnp.zeros_like(l_scr)
    acc_scr[...] = jnp.zeros_like(acc_scr)

    @pl.loop(0, qi + 1)                                       # skip key blocks above the diagonal
    def _(kb):
        k_start = pl.multiple_of(kb * tq, tq)
        k_blk = k_scr[:, pl.ds(k_start, tq), :]               # (nh, tq, dh) bf16
        v_blk = v_scr[:, pl.ds(k_start, tq), :]
        # head-batched scores: (nh, tq, tk)
        s = jax.lax.dot_general(
            q_hm, k_blk,
            dimension_numbers=(((2,), (2,)), ((0,), (0,))),
            preferred_element_type=jnp.float32)
        q_pos = q_start + jax.lax.broadcasted_iota(jnp.int32, s.shape, 1)
        k_pos = k_start + jax.lax.broadcasted_iota(jnp.int32, s.shape, 2)
        s = jnp.where(k_pos <= q_pos, s, NEG_LARGE)

        m_prev, l_prev, acc_prev = m_scr[...], l_scr[...], acc_scr[...]
        m_new = jnp.maximum(m_prev, jnp.max(s, axis=-1, keepdims=True))
        alpha = jnp.exp(m_prev - m_new)
        p = jnp.exp(s - m_new)
        pv = jax.lax.dot_general(                             # (nh, tq, dh) f32
            p.astype(jnp.bfloat16), v_blk,
            dimension_numbers=(((2,), (1,)), ((0,), (0,))),
            preferred_element_type=jnp.float32)
        l_scr[...] = alpha * l_prev + jnp.sum(p, axis=-1, keepdims=True)
        acc_scr[...] = alpha * acc_prev + pv
        m_scr[...] = m_new

    inv_l = pl.reciprocal(l_scr[...], approx=True)            # EUP slot
    ctx = (acc_scr[...] * inv_l).astype(jnp.bfloat16)         # (nh, tq, dh)

    # ---- output projection: sum_h ctx_h @ Wp_h  (== concat(heads) @ Wp) ----
    attn = jnp.zeros((tq, H), jnp.float32)
    for h in range(num_heads):
        attn = attn + jnp.dot(ctx[h], wph_ref[h], preferred_element_type=jnp.float32)

    # ---- residual + LayerNorm 0 ---------------------------------------------
    x1 = _layernorm(xq + attn, g0_ref[...], be0_ref[...])

    # ---- MLP: Linear -> exact GELU -> Linear, chunked over the 4H dim -------
    H4 = w1_ref.shape[1]
    chunk = 512 if (H4 > 512 and H4 % 512 == 0) else H4
    x1_bf = x1.astype(jnp.bfloat16)
    inv_sqrt2 = 1.0 / math.sqrt(2.0)
    mlp = jnp.zeros((tq, H), jnp.float32)
    for c0 in range(0, H4, chunk):
        h1 = jnp.dot(x1_bf, w1_ref[:, c0:c0 + chunk],
                     preferred_element_type=jnp.float32) + b1_ref[:, c0:c0 + chunk]
        h1 = 0.5 * h1 * (1.0 + jax.lax.erf(h1 * inv_sqrt2))   # exact (erf) GELU
        mlp = mlp + jnp.dot(h1.astype(jnp.bfloat16), w2_ref[c0:c0 + chunk, :],
                            preferred_element_type=jnp.float32)
    mlp = mlp + b2_ref[...]

    # ---- residual + LayerNorm 1 ---------------------------------------------
    o_ref[0] = _layernorm(x1 + mlp, g1_ref[...], be1_ref[...])


def _pick_block_q(T):
    for cand in (256, 128, 64, 32, 16, 8):
        if T % cand == 0:
            return cand
    return T  # falls back to the full (untiled) sequence


def transformer_block(x, params):
    B, T, H = x.shape
    assert H % NUM_HEADS == 0
    dh = H // NUM_HEADS
    tq = _pick_block_q(T)
    nq = T // tq

    # Weights are pre-arranged per head and pre-cast to bf16 (MXU operands);
    # biases / LayerNorm params stay f32.  Accumulation inside the kernel is f32.
    def heads_in(w):   # (H, H) -> (nh, H, dh): per-head output columns
        return w.reshape(H, NUM_HEADS, dh).transpose(1, 0, 2).astype(jnp.bfloat16)

    wqh = heads_in(params["wq"])
    wkh = heads_in(params["wk"])
    wvh = heads_in(params["wv"])
    wph = params["wp"].reshape(NUM_HEADS, dh, H).astype(jnp.bfloat16)
    w1 = params["w1"].astype(jnp.bfloat16)
    w2 = params["w2"].astype(jnp.bfloat16)
    weights = (wqh, wkh, wvh, wph, w1, params["b1"], w2, params["b2"],
               params["g0"], params["be0"], params["g1"], params["be1"])

    def const_spec(a):
        n = a.ndim
        return pl.BlockSpec(a.shape, lambda b, q, _n=n: (0,) * _n)

    in_specs = [
        pl.BlockSpec((1, T, H), lambda b, q: (b, 0, 0)),      # full sequence (K/V source)
        pl.BlockSpec((1, tq, H), lambda b, q: (b, q, 0)),     # query block
    ] + [const_spec(w) for w in weights]

    kernel = functools.partial(transformer_block_kernel,
                               num_heads=NUM_HEADS, block_q=tq)

    return pl.pallas_call(
        kernel,
        out_shape=jax.ShapeDtypeStruct((B, T, H), jnp.float32),
        grid=(B, nq),
        in_specs=in_specs,
        out_specs=pl.BlockSpec((1, tq, H), lambda b, q: (b, q, 0)),
        scratch_shapes=[
            pltpu.VMEM((NUM_HEADS, tq, dh), jnp.bfloat16),    # q (head-major)
            pltpu.VMEM((NUM_HEADS, T, dh), jnp.bfloat16),     # k (persists across q blocks)
            pltpu.VMEM((NUM_HEADS, T, dh), jnp.bfloat16),     # v (persists across q blocks)
            pltpu.VMEM((NUM_HEADS, tq, 1), jnp.float32),      # online-softmax max
            pltpu.VMEM((NUM_HEADS, tq, 1), jnp.float32),      # online-softmax denom
            pltpu.VMEM((NUM_HEADS, tq, dh), jnp.float32),     # attention accumulator
        ],
        compiler_params=pltpu.CompilerParams(
            dimension_semantics=("parallel", "arbitrary"),
            vmem_limit_bytes=48 * 1024 * 1024),
    )(x, x, *weights)


def reference_block(x, p):
    """Pure-JAX f32 reference mirroring the PyTorch forward exactly."""
    B, T, H = x.shape
    dh = H // NUM_HEADS

    def split_heads(a):
        return a.reshape(B, T, NUM_HEADS, dh).transpose(0, 2, 1, 3)

    q = split_heads(x @ p["wq"])
    k = split_heads(x @ p["wk"])
    v = split_heads(x @ p["wv"])
    s = jnp.einsum("bhqd,bhkd->bhqk", q, k) / math.sqrt(dh)
    mask = jnp.tril(jnp.ones((T, T)))
    s = jnp.where(mask == 0, -jnp.inf, s)
    w = jax.nn.softmax(s, axis=-1)
    a = jnp.einsum("bhqk,bhkd->bhqd", w, v).transpose(0, 2, 1, 3).reshape(B, T, H)
    a = a @ p["wp"]

    x1 = _layernorm(x + a, p["g0"], p["be0"])
    h = jax.nn.gelu(x1 @ p["w1"] + p["b1"], approximate=False)
    x2 = x1 + h @ p["w2"] + p["b2"]
    return _layernorm(x2, p["g1"], p["be1"])


def make_params(key, hidden_dim):
    H = hidden_dim
    ks = jax.random.split(key, 8)
    scale = 0.1
    return {
        "wq": jax.random.normal(ks[0], (H, H), jnp.float32) * scale,
        "wk": jax.random.normal(ks[1], (H, H), jnp.float32) * scale,
        "wv": jax.random.normal(ks[2], (H, H), jnp.float32) * scale,
        "wp": jax.random.normal(ks[3], (H, H), jnp.float32) * scale,
        "w1": jax.random.normal(ks[4], (H, 4 * H), jnp.float32) * scale,
        "b1": jax.random.normal(ks[5], (1, 4 * H), jnp.float32) * scale,
        "w2": jax.random.normal(ks[6], (4 * H, H), jnp.float32) * scale,
        "b2": jax.random.normal(ks[7], (1, H), jnp.float32) * scale,
        "g0": jnp.ones((1, H), jnp.float32),
        "be0": jnp.zeros((1, H), jnp.float32),
        "g1": jnp.ones((1, H), jnp.float32),
        "be1": jnp.zeros((1, H), jnp.float32),
    }


if __name__ == "__main__":
    B, T, H = 2, 8, 32
    key = jax.random.PRNGKey(0)
    kx, kp = jax.random.split(key)
    x = jax.random.normal(kx, (B, T, H), jnp.float32)
    params = make_params(kp, H)

    out = jax.block_until_ready(transformer_block(x, params))
    ref = jax.block_until_ready(reference_block(x, params))

    assert out.shape == (B, T, H)
    max_diff = jnp.max(jnp.abs(out - ref))
    # bf16 MXU operands (f32 accumulation) vs the f32 reference -> relaxed tol.
    assert jnp.allclose(out, ref, atol=2e-2, rtol=2e-2), f"max abs diff {max_diff}"

    print("KERNEL_OK")
</pallas_src>

<mosaic_0001>
module attributes {stable_mosaic.version = 11 : i64} {
  func.func @transformer_block_kernel(%arg0: i32, %arg1: i32, %arg2: memref<1x8x32xf32, #tpu.memory_space<vmem>>, %arg3: memref<1x8x32xf32, #tpu.memory_space<vmem>>, %arg4: memref<4x32x8xbf16, #tpu.memory_space<vmem>>, %arg5: memref<4x32x8xbf16, #tpu.memory_space<vmem>>, %arg6: memref<4x32x8xbf16, #tpu.memory_space<vmem>>, %arg7: memref<4x8x32xbf16, #tpu.memory_space<vmem>>, %arg8: memref<32x128xbf16, #tpu.memory_space<vmem>>, %arg9: memref<1x128xf32, #tpu.memory_space<vmem>>, %arg10: memref<128x32xbf16, #tpu.memory_space<vmem>>, %arg11: memref<1x32xf32, #tpu.memory_space<vmem>>, %arg12: memref<1x32xf32, #tpu.memory_space<vmem>>, %arg13: memref<1x32xf32, #tpu.memory_space<vmem>>, %arg14: memref<1x32xf32, #tpu.memory_space<vmem>>, %arg15: memref<1x32xf32, #tpu.memory_space<vmem>>, %arg16: memref<1x8x32xf32, #tpu.memory_space<vmem>>, %arg17: memref<4x8x8xbf16, #tpu.memory_space<vmem>>, %arg18: memref<4x8x8xbf16, #tpu.memory_space<vmem>>, %arg19: memref<4x8x8xbf16, #tpu.memory_space<vmem>>, %arg20: memref<4x8x1xf32, #tpu.memory_space<vmem>>, %arg21: memref<4x8x1xf32, #tpu.memory_space<vmem>>, %arg22: memref<4x8x8xf32, #tpu.memory_space<vmem>>) attributes {dimension_semantics = [#tpu.dimension_semantics<parallel>, #tpu.dimension_semantics<arbitrary>], iteration_bounds = array<i64: 2, 1>, scalar_prefetch = 0 : i64, scratch_operands = 6 : i64, tpu.core_type = #tpu.core_type<tc>, window_params = [{transform_indices = @transform_0, window_bounds = array<i64: 1, 8, 32>}, {transform_indices = @transform_1, window_bounds = array<i64: 1, 8, 32>}, {pipeline_mode = #tpu.pipeline_mode<synchronous>, transform_indices = @transform_2, window_bounds = array<i64: 4, 32, 8>}, {pipeline_mode = #tpu.pipeline_mode<synchronous>, transform_indices = @transform_3, window_bounds = array<i64: 4, 32, 8>}, {pipeline_mode = #tpu.pipeline_mode<synchronous>, transform_indices = @transform_4, window_bounds = array<i64: 4, 32, 8>}, {pipeline_mode = #tpu.pipeline_mode<synchronous>, transform_indices = @transform_5, window_bounds = array<i64: 4, 8, 32>}, {pipeline_mode = #tpu.pipeline_mode<synchronous>, transform_indices = @transform_6, window_bounds = array<i64: 32, 128>}, {pipeline_mode = #tpu.pipeline_mode<synchronous>, transform_indices = @transform_7, window_bounds = array<i64: 1, 128>}, {pipeline_mode = #tpu.pipeline_mode<synchronous>, transform_indices = @transform_8, window_bounds = array<i64: 128, 32>}, {pipeline_mode = #tpu.pipeline_mode<synchronous>, transform_indices = @transform_9, window_bounds = array<i64: 1, 32>}, {pipeline_mode = #tpu.pipeline_mode<synchronous>, transform_indices = @transform_10, window_bounds = array<i64: 1, 32>}, {pipeline_mode = #tpu.pipeline_mode<synchronous>, transform_indices = @transform_11, window_bounds = array<i64: 1, 32>}, {pipeline_mode = #tpu.pipeline_mode<synchronous>, transform_indices = @transform_12, window_bounds = array<i64: 1, 32>}, {pipeline_mode = #tpu.pipeline_mode<synchronous>, transform_indices = @transform_13, window_bounds = array<i64: 1, 32>}, {transform_indices = @transform_14, window_bounds = array<i64: 1, 8, 32>}]} {
    %c8_i32 = arith.constant 8 : i32
    %0 = arith.muli %arg1, %c8_i32 : i32
    %c0_i32 = arith.constant 0 : i32
    %1 = arith.cmpi eq, %arg1, %c0_i32 : i32
    %2 = arith.extui %1 : i1 to i32
    %c0_i32_0 = arith.constant 0 : i32
    %3 = arith.cmpi ne, %2, %c0_i32_0 : i32
    scf.if %3 {
      %c0_112 = arith.constant 0 : index
      %c0_113 = arith.constant 0 : index
      %c0_114 = arith.constant 0 : index
      %167 = vector.load %arg2[%c0_112, %c0_113, %c0_114] : memref<1x8x32xf32, #tpu.memory_space<vmem>>, vector<1x8x32xf32>
      %168 = vector.shape_cast %167 : vector<1x8x32xf32> to vector<8x32xf32>
      %169 = arith.truncf %168 : vector<8x32xf32> to vector<8x32xbf16>
      %c0_115 = arith.constant 0 : index
      %c0_116 = arith.constant 0 : index
      %c0_117 = arith.constant 0 : index
      %170 = vector.load %arg5[%c0_115, %c0_116, %c0_117] : memref<4x32x8xbf16, #tpu.memory_space<vmem>>, vector<1x32x8xbf16>
      %171 = vector.shape_cast %170 : vector<1x32x8xbf16> to vector<32x8xbf16>
      %cst_118 = arith.constant dense<0.000000e+00> : vector<8x8xf32>
      %172 = tpu.matmul %169, %171, %cst_118 {dimension_numbers = #tpu.dot_dimension_numbers<[1], [0], [0], [1], [0, 0, 1, 1], [], []>} : vector<8x32xbf16>, vector<32x8xbf16>, vector<8x8xf32> -> vector<8x8xf32>
      %173 = arith.truncf %172 : vector<8x8xf32> to vector<8x8xbf16>
      %c0_119 = arith.constant 0 : index
      %c0_120 = arith.constant 0 : index
      %c0_121 = arith.constant 0 : index
      %174 = vector.load %arg18[%c0_119, %c0_120, %c0_121] : memref<4x8x8xbf16, #tpu.memory_space<vmem>>, vector<1x8x8xbf16>
      %175 = vector.shape_cast %174 : vector<1x8x8xbf16> to vector<8x8xbf16>
      %176 = vector.shape_cast %173 : vector<8x8xbf16> to vector<1x8x8xbf16>
      tpu.vector_store %arg18[%c0_119, %c0_120, %c0_121], %176 {strides = array<i32>} : memref<4x8x8xbf16, #tpu.memory_space<vmem>>, vector<1x8x8xbf16>,
      %c0_122 = arith.constant 0 : index
      %c0_123 = arith.constant 0 : index
      %c0_124 = arith.constant 0 : index
      %177 = vector.load %arg6[%c0_122, %c0_123, %c0_124] : memref<4x32x8xbf16, #tpu.memory_space<vmem>>, vector<1x32x8xbf16>
      %178 = vector.shape_cast %177 : vector<1x32x8xbf16> to vector<32x8xbf16>
      %cst_125 = arith.constant dense<0.000000e+00> : vector<8x8xf32>
      %179 = tpu.matmul %169, %178, %cst_125 {dimension_numbers = #tpu.dot_dimension_numbers<[1], [0], [0], [1], [0, 0, 1, 1], [], []>} : vector<8x32xbf16>, vector<32x8xbf16>, vector<8x8xf32> -> vector<8x8xf32>
      %180 = arith.truncf %179 : vector<8x8xf32> to vector<8x8xbf16>
      %c0_126 = arith.constant 0 : index
      %c0_127 = arith.constant 0 : index
      %c0_128 = arith.constant 0 : index
      %181 = vector.load %arg19[%c0_126, %c0_127, %c0_128] : memref<4x8x8xbf16, #tpu.memory_space<vmem>>, vector<1x8x8xbf16>
      %182 = vector.shape_cast %181 : vector<1x8x8xbf16> to vector<8x8xbf16>
      %183 = vector.shape_cast %180 : vector<8x8xbf16> to vector<1x8x8xbf16>
      tpu.vector_store %arg19[%c0_126, %c0_127, %c0_128], %183 {strides = array<i32>} : memref<4x8x8xbf16, #tpu.memory_space<vmem>>, vector<1x8x8xbf16>,
      %c1_129 = arith.constant 1 : index
      %c0_130 = arith.constant 0 : index
      %c0_131 = arith.constant 0 : index
      %184 = vector.load %arg5[%c1_129, %c0_130, %c0_131] : memref<4x32x8xbf16, #tpu.memory_space<vmem>>, vector<1x32x8xbf16>
      %185 = vector.shape_cast %184 : vector<1x32x8xbf16> to vector<32x8xbf16>
      %cst_132 = arith.constant dense<0.000000e+00> : vector<8x8xf32>
      %186 = tpu.matmul %169, %185, %cst_132 {dimension_numbers = #tpu.dot_dimension_numbers<[1], [0], [0], [1], [0, 0, 1, 1], [], []>} : vector<8x32xbf16>, vector<32x8xbf16>, vector<8x8xf32> -> vector<8x8xf32>
      %187 = arith.truncf %186 : vector<8x8xf32> to vector<8x8xbf16>
      %c1_133 = arith.constant 1 : index
      %c0_134 = arith.constant 0 : index
      %c0_135 = arith.constant 0 : index
      %188 = vector.load %arg18[%c1_133, %c0_134, %c0_135] : memref<4x8x8xbf16, #tpu.memory_space<vmem>>, vector<1x8x8xbf16>
      %189 = vector.shape_cast %188 : vector<1x8x8xbf16> to vector<8x8xbf16>
      %190 = vector.shape_cast %187 : vector<8x8xbf16> to vector<1x8x8xbf16>
      tpu.vector_store %arg18[%c1_133, %c0_134, %c0_135], %190 {strides = array<i32>} : memref<4x8x8xbf16, #tpu.memory_space<vmem>>, vector<1x8x8xbf16>,
      %c1_136 = arith.constant 1 : index
      %c0_137 = arith.constant 0 : index
      %c0_138 = arith.constant 0 : index
      %191 = vector.load %arg6[%c1_136, %c0_137, %c0_138] : memref<4x32x8xbf16, #tpu.memory_space<vmem>>, vector<1x32x8xbf16>
      %192 = vector.shape_cast %191 : vector<1x32x8xbf16> to vector<32x8xbf16>
      %cst_139 = arith.constant dense<0.000000e+00> : vector<8x8xf32>
      %193 = tpu.matmul %169, %192, %cst_139 {dimension_numbers = #tpu.dot_dimension_numbers<[1], [0], [0], [1], [0, 0, 1, 1], [], []>} : vector<8x32xbf16>, vector<32x8xbf16>, vector<8x8xf32> -> vector<8x8xf32>
      %194 = arith.truncf %193 : vector<8x8xf32> to vector<8x8xbf16>
      %c1_140 = arith.constant 1 : index
      %c0_141 = arith.constant 0 : index
      %c0_142 = arith.constant 0 : index
      %195 = vector.load %arg19[%c1_140, %c0_141, %c0_142] : memref<4x8x8xbf16, #tpu.memory_space<vmem>>, vector<1x8x8xbf16>
      %196 = vector.shape_cast %195 : vector<1x8x8xbf16> to vector<8x8xbf16>
      %197 = vector.shape_cast %194 : vector<8x8xbf16> to vector<1x8x8xbf16>
      tpu.vector_store %arg19[%c1_140, %c0_141, %c0_142], %197 {strides = array<i32>} : memref<4x8x8xbf16, #tpu.memory_space<vmem>>, vector<1x8x8xbf16>,
      %c2_143 = arith.constant 2 : index
      %c0_144 = arith.constant 0 : index
      %c0_145 = arith.constant 0 : index
      %198 = vector.load %arg5[%c2_143, %c0_144, %c0_145] : memref<4x32x8xbf16, #tpu.memory_space<vmem>>, vector<1x32x8xbf16>
      %199 = vector.shape_cast %198 : vector<1x32x8xbf16> to vector<32x8xbf16>
      %cst_146 = arith.constant dense<0.000000e+00> : vector<8x8xf32>
      %200 = tpu.matmul %169, %199, %cst_146 {dimension_numbers = #tpu.dot_dimension_numbers<[1], [0], [0], [1], [0, 0, 1, 1], [], []>} : vector<8x32xbf16>, vector<32x8xbf16>, vector<8x8xf32> -> vector<8x8xf32>
      %201 = arith.truncf %200 : vector<8x8xf32> to vector<8x8xbf16>
      %c2_147 = arith.constant 2 : index
      %c0_148 = arith.constant 0 : index
      %c0_149 = arith.constant 0 : index
      %202 = vector.load %arg18[%c2_147, %c0_148, %c0_149] : memref<4x8x8xbf16, #tpu.memory_space<vmem>>, vector<1x8x8xbf16>
      %203 = vector.shape_cast %202 : vector<1x8x8xbf16> to vector<8x8xbf16>
      %204 = vector.shape_cast %201 : vector<8x8xbf16> to vector<1x8x8xbf16>
      tpu.vector_store %arg18[%c2_147, %c0_148, %c0_149], %204 {strides = array<i32>} : memref<4x8x8xbf16, #tpu.memory_space<vmem>>, vector<1x8x8xbf16>,
      %c2_150 = arith.constant 2 : index
      %c0_151 = arith.constant 0 : index
      %c0_152 = arith.constant 0 : index
      %205 = vector.load %arg6[%c2_150, %c0_151, %c0_152] : memref<4x32x8xbf16, #tpu.memory_space<vmem>>, vector<1x32x8xbf16>
      %206 = vector.shape_cast %205 : vector<1x32x8xbf16> to vector<32x8xbf16>
      %cst_153 = arith.constant dense<0.000000e+00> : vector<8x8xf32>
      %207 = tpu.matmul %169, %206, %cst_153 {dimension_numbers = #tpu.dot_dimension_numbers<[1], [0], [0], [1], [0, 0, 1, 1], [], []>} : vector<8x32xbf16>, vector<32x8xbf16>, vector<8x8xf32> -> vector<8x8xf32>
      %208 = arith.truncf %207 : vector<8x8xf32> to vector<8x8xbf16>
      %c2_154 = arith.constant 2 : index
      %c0_155 = arith.constant 0 : index
      %c0_156 = arith.constant 0 : index
      %209 = vector.load %arg19[%c2_154, %c0_155, %c0_156] : memref<4x8x8xbf16, #tpu.memory_space<vmem>>, vector<1x8x8xbf16>
      %210 = vector.shape_cast %209 : vector<1x8x8xbf16> to vector<8x8xbf16>
      %211 = vector.shape_cast %208 : vector<8x8xbf16> to vector<1x8x8xbf16>
      tpu.vector_store %arg19[%c2_154, %c0_155, %c0_156], %211 {strides = array<i32>} : memref<4x8x8xbf16, #tpu.memory_space<vmem>>, vector<1x8x8xbf16>,
      %c3_157 = arith.constant 3 : index
      %c0_158 = arith.constant 0 : index
      %c0_159 = arith.constant 0 : index
      %212 = vector.load %arg5[%c3_157, %c0_158, %c0_159] : memref<4x32x8xbf16, #tpu.memory_space<vmem>>, vector<1x32x8xbf16>
      %213 = vector.shape_cast %212 : vector<1x32x8xbf16> to vector<32x8xbf16>
      %cst_160 = arith.constant dense<0.000000e+00> : vector<8x8xf32>
      %214 = tpu.matmul %169, %213, %cst_160 {dimension_numbers = #tpu.dot_dimension_numbers<[1], [0], [0], [1], [0, 0, 1, 1], [], []>} : vector<8x32xbf16>, vector<32x8xbf16>, vector<8x8xf32> -> vector<8x8xf32>
      %215 = arith.truncf %214 : vector<8x8xf32> to vector<8x8xbf16>
      %c3_161 = arith.constant 3 : index
      %c0_162 = arith.constant 0 : index
      %c0_163 = arith.constant 0 : index
      %216 = vector.load %arg18[%c3_161, %c0_162, %c0_163] : memref<4x8x8xbf16, #tpu.memory_space<vmem>>, vector<1x8x8xbf16>
      %217 = vector.shape_cast %216 : vector<1x8x8xbf16> to vector<8x8xbf16>
      %218 = vector.shape_cast %215 : vector<8x8xbf16> to vector<1x8x8xbf16>
      tpu.vector_store %arg18[%c3_161, %c0_162, %c0_163], %218 {strides = array<i32>} : memref<4x8x8xbf16, #tpu.memory_space<vmem>>, vector<1x8x8xbf16>,
      %c3_164 = arith.constant 3 : index
      %c0_165 = arith.constant 0 : index
      %c0_166 = arith.constant 0 : index
      %219 = vector.load %arg6[%c3_164, %c0_165, %c0_166] : memref<4x32x8xbf16, #tpu.memory_space<vmem>>, vector<1x32x8xbf16>
      %220 = vector.shape_cast %219 : vector<1x32x8xbf16> to vector<32x8xbf16>
      %cst_167 = arith.constant dense<0.000000e+00> : vector<8x8xf32>
      %221 = tpu.matmul %169, %220, %cst_167 {dimension_numbers = #tpu.dot_dimension_numbers<[1], [0], [0], [1], [0, 0, 1, 1], [], []>} : vector<8x32xbf16>, vector<32x8xbf16>, vector<8x8xf32> -> vector<8x8xf32>
      %222 = arith.truncf %221 : vector<8x8xf32> to vector<8x8xbf16>
      %c3_168 = arith.constant 3 : index
      %c0_169 = arith.constant 0 : index
      %c0_170 = arith.constant 0 : index
      %223 = vector.load %arg19[%c3_168, %c0_169, %c0_170] : memref<4x8x8xbf16, #tpu.memory_space<vmem>>, vector<1x8x8xbf16>
      %224 = vector.shape_cast %223 : vector<1x8x8xbf16> to vector<8x8xbf16>
      %225 = vector.shape_cast %222 : vector<8x8xbf16> to vector<1x8x8xbf16>
      tpu.vector_store %arg19[%c3_168, %c0_169, %c0_170], %225 {strides = array<i32>} : memref<4x8x8xbf16, #tpu.memory_space<vmem>>, vector<1x8x8xbf16>,
    } else {
    }
    %c0 = arith.constant 0 : index
    %c0_1 = arith.constant 0 : index
    %c0_2 = arith.constant 0 : index
    %4 = vector.load %arg3[%c0, %c0_1, %c0_2] : memref<1x8x32xf32, #tpu.memory_space<vmem>>, vector<1x8x32xf32>
    %5 = vector.shape_cast %4 : vector<1x8x32xf32> to vector<8x32xf32>
    %6 = arith.truncf %5 : vector<8x32xf32> to vector<8x32xbf16>
    %c0_3 = arith.constant 0 : index
    %c0_4 = arith.constant 0 : index
    %c0_5 = arith.constant 0 : index
    %7 = vector.load %arg4[%c0_3, %c0_4, %c0_5] : memref<4x32x8xbf16, #tpu.memory_space<vmem>>, vector<1x32x8xbf16>
    %8 = vector.shape_cast %7 : vector<1x32x8xbf16> to vector<32x8xbf16>
    %cst = arith.constant dense<0.000000e+00> : vector<8x8xf32>
    %9 = tpu.matmul %6, %8, %cst {dimension_numbers = #tpu.dot_dimension_numbers<[1], [0], [0], [1], [0, 0, 1, 1], [], []>} : vector<8x32xbf16>, vector<32x8xbf16>, vector<8x8xf32> -> vector<8x8xf32>
    %cst_6 = arith.constant 0.353553385 : f32
    %10 = vector.broadcast %cst_6 : f32 to vector<8x8xf32>
    %11 = arith.mulf %9, %10 : vector<8x8xf32>
    %12 = arith.truncf %11 : vector<8x8xf32> to vector<8x8xbf16>
    %c0_7 = arith.constant 0 : index
    %c0_8 = arith.constant 0 : index
    %c0_9 = arith.constant 0 : index
    %13 = vector.load %arg17[%c0_7, %c0_8, %c0_9] : memref<4x8x8xbf16, #tpu.memory_space<vmem>>, vector<1x8x8xbf16>
    %14 = vector.shape_cast %13 : vector<1x8x8xbf16> to vector<8x8xbf16>
    %15 = vector.shape_cast %12 : vector<8x8xbf16> to vector<1x8x8xbf16>
    tpu.vector_store %arg17[%c0_7, %c0_8, %c0_9], %15 {strides = array<i32>} : memref<4x8x8xbf16, #tpu.memory_space<vmem>>, vector<1x8x8xbf16>,
    %c1 = arith.constant 1 : index
    %c0_10 = arith.constant 0 : index
    %c0_11 = arith.constant 0 : index
    %16 = vector.load %arg4[%c1, %c0_10, %c0_11] : memref<4x32x8xbf16, #tpu.memory_space<vmem>>, vector<1x32x8xbf16>
    %17 = vector.shape_cast %16 : vector<1x32x8xbf16> to vector<32x8xbf16>
    %cst_12 = arith.constant dense<0.000000e+00> : vector<8x8xf32>
    %18 = tpu.matmul %6, %17, %cst_12 {dimension_numbers = #tpu.dot_dimension_numbers<[1], [0], [0], [1], [0, 0, 1, 1], [], []>} : vector<8x32xbf16>, vector<32x8xbf16>, vector<8x8xf32> -> vector<8x8xf32>
    %cst_13 = arith.constant 0.353553385 : f32
    %19 = vector.broadcast %cst_13 : f32 to vector<8x8xf32>
    %20 = arith.mulf %18, %19 : vector<8x8xf32>
    %21 = arith.truncf %20 : vector<8x8xf32> to vector<8x8xbf16>
    %c1_14 = arith.constant 1 : index
    %c0_15 = arith.constant 0 : index
    %c0_16 = arith.constant 0 : index
    %22 = vector.load %arg17[%c1_14, %c0_15, %c0_16] : memref<4x8x8xbf16, #tpu.memory_space<vmem>>, vector<1x8x8xbf16>
    %23 = vector.shape_cast %22 : vector<1x8x8xbf16> to vector<8x8xbf16>
    %24 = vector.shape_cast %21 : vector<8x8xbf16> to vector<1x8x8xbf16>
    tpu.vector_store %arg17[%c1_14, %c0_15, %c0_16], %24 {strides = array<i32>} : memref<4x8x8xbf16, #tpu.memory_space<vmem>>, vector<1x8x8xbf16>,
    %c2 = arith.constant 2 : index
    %c0_17 = arith.constant 0 : index
    %c0_18 = arith.constant 0 : index
    %25 = vector.load %arg4[%c2, %c0_17, %c0_18] : memref<4x32x8xbf16, #tpu.memory_space<vmem>>, vector<1x32x8xbf16>
    %26 = vector.shape_cast %25 : vector<1x32x8xbf16> to vector<32x8xbf16>
    %cst_19 = arith.constant dense<0.000000e+00> : vector<8x8xf32>
    %27 = tpu.matmul %6, %26, %cst_19 {dimension_numbers = #tpu.dot_dimension_numbers<[1], [0], [0], [1], [0, 0, 1, 1], [], []>} : vector<8x32xbf16>, vector<32x8xbf16>, vector<8x8xf32> -> vector<8x8xf32>
    %cst_20 = arith.constant 0.353553385 : f32
    %28 = vector.broadcast %cst_20 : f32 to vector<8x8xf32>
    %29 = arith.mulf %27, %28 : vector<8x8xf32>
    %30 = arith.truncf %29 : vector<8x8xf32> to vector<8x8xbf16>
    %c2_21 = arith.constant 2 : index
    %c0_22 = arith.constant 0 : index
    %c0_23 = arith.constant 0 : index
    %31 = vector.load %arg17[%c2_21, %c0_22, %c0_23] : memref<4x8x8xbf16, #tpu.memory_space<vmem>>, vector<1x8x8xbf16>
    %32 = vector.shape_cast %31 : vector<1x8x8xbf16> to vector<8x8xbf16>
    %33 = vector.shape_cast %30 : vector<8x8xbf16> to vector<1x8x8xbf16>
    tpu.vector_store %arg17[%c2_21, %c0_22, %c0_23], %33 {strides = array<i32>} : memref<4x8x8xbf16, #tpu.memory_space<vmem>>, vector<1x8x8xbf16>,
    %c3 = arith.constant 3 : index
    %c0_24 = arith.constant 0 : index
    %c0_25 = arith.constant 0 : index
    %34 = vector.load %arg4[%c3, %c0_24, %c0_25] : memref<4x32x8xbf16, #tpu.memory_space<vmem>>, vector<1x32x8xbf16>
    %35 = vector.shape_cast %34 : vector<1x32x8xbf16> to vector<32x8xbf16>
    %cst_26 = arith.constant dense<0.000000e+00> : vector<8x8xf32>
    %36 = tpu.matmul %6, %35, %cst_26 {dimension_numbers = #tpu.dot_dimension_numbers<[1], [0], [0], [1], [0, 0, 1, 1], [], []>} : vector<8x32xbf16>, vector<32x8xbf16>, vector<8x8xf32> -> vector<8x8xf32>
    %cst_27 = arith.constant 0.353553385 : f32
    %37 = vector.broadcast %cst_27 : f32 to vector<8x8xf32>
    %38 = arith.mulf %36, %37 : vector<8x8xf32>
    %39 = arith.truncf %38 : vector<8x8xf32> to vector<8x8xbf16>
    %c3_28 = arith.constant 3 : index
    %c0_29 = arith.constant 0 : index
    %c0_30 = arith.constant 0 : index
    %40 = vector.load %arg17[%c3_28, %c0_29, %c0_30] : memref<4x8x8xbf16, #tpu.memory_space<vmem>>, vector<1x8x8xbf16>
    %41 = vector.shape_cast %40 : vector<1x8x8xbf16> to vector<8x8xbf16>
    %42 = vector.shape_cast %39 : vector<8x8xbf16> to vector<1x8x8xbf16>
    tpu.vector_store %arg17[%c3_28, %c0_29, %c0_30], %42 {strides = array<i32>} : memref<4x8x8xbf16, #tpu.memory_space<vmem>>, vector<1x8x8xbf16>,
    %c0_31 = arith.constant 0 : index
    %c0_32 = arith.constant 0 : index
    %c0_33 = arith.constant 0 : index
    %43 = vector.load %arg17[%c0_31, %c0_32, %c0_33] : memref<4x8x8xbf16, #tpu.memory_space<vmem>>, vector<4x8x8xbf16>
    %cst_34 = arith.constant -1.000000e+30 : f32
    %44 = vector.broadcast %cst_34 : f32 to vector<4x8x1xf32>
    %c0_35 = arith.constant 0 : index
    %c0_36 = arith.constant 0 : index
    %c0_37 = arith.constant 0 : index
    %45 = vector.load %arg20[%c0_35, %c0_36, %c0_37] : memref<4x8x1xf32, #tpu.memory_space<vmem>>, vector<4x8x1xf32>
    tpu.vector_store %arg20[%c0_35, %c0_36, %c0_37], %44 {strides = array<i32>} : memref<4x8x1xf32, #tpu.memory_space<vmem>>, vector<4x8x1xf32>,
    %cst_38 = arith.constant 0.000000e+00 : f32
    %46 = vector.broadcast %cst_38 : f32 to vector<4x8x1xf32>
    %c0_39 = arith.constant 0 : index
    %c0_40 = arith.constant 0 : index
    %c0_41 = arith.constant 0 : index
    %47 = vector.load %arg21[%c0_39, %c0_40, %c0_41] : memref<4x8x1xf32, #tpu.memory_space<vmem>>, vector<4x8x1xf32>
    tpu.vector_store %arg21[%c0_39, %c0_40, %c0_41], %46 {strides = array<i32>} : memref<4x8x1xf32, #tpu.memory_space<vmem>>, vector<4x8x1xf32>,
    %cst_42 = arith.constant 0.000000e+00 : f32
    %48 = vector.broadcast %cst_42 : f32 to vector<4x8x8xf32>
    %c0_43 = arith.constant 0 : index
    %c0_44 = arith.constant 0 : index
    %c0_45 = arith.constant 0 : index
    %49 = vector.load %arg22[%c0_43, %c0_44, %c0_45] : memref<4x8x8xf32, #tpu.memory_space<vmem>>, vector<4x8x8xf32>
    tpu.vector_store %arg22[%c0_43, %c0_44, %c0_45], %48 {strides = array<i32>} : memref<4x8x8xf32, #tpu.memory_space<vmem>>, vector<4x8x8xf32>,
    %c1_i32 = arith.constant 1 : i32
    %50 = arith.addi %arg1, %c1_i32 : i32
    %c0_i32_46 = arith.constant 0 : i32
    %51 = arith.subi %50, %c0_i32_46 : i32
    %c1_i32_47 = arith.constant 1 : i32
    %c1_i32_48 = arith.constant 1 : i32
    %52 = arith.subi %c1_i32_47, %c1_i32_48 : i32
    %53 = arith.addi %51, %52 : i32
    %c1_i32_49 = arith.constant 1 : i32
    %54 = arith.divsi %53, %c1_i32_49 : i32
    %c1_i32_50 = arith.constant 1 : i32
    %c0_i32_51 = arith.constant 0 : i32
    %c0_i32_52 = arith.constant 0 : i32
    %55 = arith.subi %54, %c0_i32_52 : i32
    %56 = arith.addi %c0_i32_52, %55 : i32
    %c1_i32_53 = arith.constant 1 : i32
    scf.for %arg23 = %c0_i32_52 to %56 step %c1_i32_53  : i32 {
      %167 = arith.muli %arg23, %c1_i32_50 : i32
      %168 = arith.addi %c0_i32_51, %167 : i32
      %c8_i32_112 = arith.constant 8 : i32
      %169 = arith.muli %168, %c8_i32_112 : i32
      %170 = tpu.assume_multiple %169, 8 : i32
      %c0_113 = arith.constant 0 : index
      %171 = arith.index_cast %170 : i32 to index
      %c0_114 = arith.constant 0 : index
      %172 = vector.load %arg18[%c0_113, %171, %c0_114] : memref<4x8x8xbf16, #tpu.memory_space<vmem>>, vector<4x8x8xbf16>
      %c0_115 = arith.constant 0 : index
      %173 = arith.index_cast %170 : i32 to index
      %c0_116 = arith.constant 0 : index
      %174 = vector.load %arg19[%c0_115, %173, %c0_116] : memref<4x8x8xbf16, #tpu.memory_space<vmem>>, vector<4x8x8xbf16>
      %cst_117 = arith.constant dense<0.000000e+00> : vector<4x8x8xf32>
      %175 = tpu.matmul %43, %172, %cst_117 {dimension_numbers = #tpu.dot_dimension_numbers<[2], [2], [1], [1], [0, 0, 0, 1, 1, 1], [0], [0]>} : vector<4x8x8xbf16>, vector<4x8x8xbf16>, vector<4x8x8xf32> -> vector<4x8x8xf32>
      %176 = tpu.iota {dimensions = array<i32: 1>} : vector<4x8x8xi32>
      %177 = vector.broadcast %0 : i32 to vector<4x8x8xi32>
      %178 = arith.addi %177, %176 : vector<4x8x8xi32>
      %179 = tpu.iota {dimensions = array<i32: 2>} : vector<4x8x8xi32>
      %180 = vector.broadcast %170 : i32 to vector<4x8x8xi32>
      %181 = arith.addi %180, %179 : vector<4x8x8xi32>
      %182 = arith.cmpi sle, %181, %178 : vector<4x8x8xi32>
      %cst_118 = arith.constant -1.000000e+30 : f32
      %183 = vector.broadcast %cst_118 : f32 to vector<4x8x8xf32>
      %184 = arith.select %182, %175, %183 : vector<4x8x8xi1>, vector<4x8x8xf32>
      %c0_119 = arith.constant 0 : index
      %c0_120 = arith.constant 0 : index
      %c0_121 = arith.constant 0 : index
      %185 = vector.load %arg20[%c0_119, %c0_120, %c0_121] : memref<4x8x1xf32, #tpu.memory_space<vmem>>, vector<4x8x1xf32>
      %c0_122 = arith.constant 0 : index
      %c0_123 = arith.constant 0 : index
      %c0_124 = arith.constant 0 : index
      %186 = vector.load %arg21[%c0_122, %c0_123, %c0_124] : memref<4x8x1xf32, #tpu.memory_space<vmem>>, vector<4x8x1xf32>
      %c0_125 = arith.constant 0 : index
      %c0_126 = arith.constant 0 : index
      %c0_127 = arith.constant 0 : index
      %187 = vector.load %arg22[%c0_125, %c0_126, %c0_127] : memref<4x8x8xf32, #tpu.memory_space<vmem>>, vector<4x8x8xf32>
      %cst_128 = arith.constant dense<0xFF800000> : vector<4x8xf32>
      %188 = vector.multi_reduction <maximumf>, %184, %cst_128 [2] : vector<4x8x8xf32> to vector<4x8xf32>
      %189 = vector.shape_cast %188 : vector<4x8xf32> to vector<4x8x1xf32>
      %190 = arith.maximumf %185, %189 : vector<4x8x1xf32>
      %191 = arith.subf %185, %190 : vector<4x8x1xf32>
      %192 = math.exp %191 : vector<4x8x1xf32>
      %193 = vector.broadcast %190 : vector<4x8x1xf32> to vector<4x8x8xf32>
      %194 = arith.subf %184, %193 : vector<4x8x8xf32>
      %195 = math.exp %194 : vector<4x8x8xf32>
      %196 = arith.truncf %195 : vector<4x8x8xf32> to vector<4x8x8xbf16>
      %cst_129 = arith.constant dense<0.000000e+00> : vector<4x8x8xf32>
      %197 = tpu.matmul %196, %174, %cst_129 {dimension_numbers = #tpu.dot_dimension_numbers<[2], [1], [1], [2], [0, 0, 0, 1, 1, 2], [0], [0]>} : vector<4x8x8xbf16>, vector<4x8x8xbf16>, vector<4x8x8xf32> -> vector<4x8x8xf32>
      %198 = arith.mulf %192, %186 : vector<4x8x1xf32>
      %cst_130 = arith.constant dense<0.000000e+00> : vector<4x8xf32>
      %199 = vector.multi_reduction <add>, %195, %cst_130 [2] : vector<4x8x8xf32> to vector<4x8xf32>
      %200 = vector.shape_cast %199 : vector<4x8xf32> to vector<4x8x1xf32>
      %201 = arith.addf %198, %200 : vector<4x8x1xf32>
      %c0_131 = arith.constant 0 : index
      %c0_132 = arith.constant 0 : index
      %c0_133 = arith.constant 0 : index
      %202 = vector.load %arg21[%c0_131, %c0_132, %c0_133] : memref<4x8x1xf32, #tpu.memory_space<vmem>>, vector<4x8x1xf32>
      tpu.vector_store %arg21[%c0_131, %c0_132, %c0_133], %201 {strides = array<i32>} : memref<4x8x1xf32, #tpu.memory_space<vmem>>, vector<4x8x1xf32>,
      %203 = vector.broadcast %192 : vector<4x8x1xf32> to vector<4x8x8xf32>
      %204 = arith.mulf %203, %187 : vector<4x8x8xf32>
      %205 = arith.addf %204, %197 : vector<4x8x8xf32>
      %c0_134 = arith.constant 0 : index
      %c0_135 = arith.constant 0 : index
      %c0_136 = arith.constant 0 : index
      %206 = vector.load %arg22[%c0_134, %c0_135, %c0_136] : memref<4x8x8xf32, #tpu.memory_space<vmem>>, vector<4x8x8xf32>
      tpu.vector_store %arg22[%c0_134, %c0_135, %c0_136], %205 {strides = array<i32>} : memref<4x8x8xf32, #tpu.memory_space<vmem>>, vector<4x8x8xf32>,
      %c0_137 = arith.constant 0 : index
      %c0_138 = arith.constant 0 : index
      %c0_139 = arith.constant 0 : index
      %207 = vector.load %arg20[%c0_137, %c0_138, %c0_139] : memref<4x8x1xf32, #tpu.memory_space<vmem>>, vector<4x8x1xf32>
      tpu.vector_store %arg20[%c0_137, %c0_138, %c0_139], %190 {strides = array<i32>} : memref<4x8x1xf32, #tpu.memory_space<vmem>>, vector<4x8x1xf32>,
    }
    %c0_54 = arith.constant 0 : index
    %c0_55 = arith.constant 0 : index
    %c0_56 = arith.constant 0 : index
    %57 = vector.load %arg21[%c0_54, %c0_55, %c0_56] : memref<4x8x1xf32, #tpu.memory_space<vmem>>, vector<4x8x1xf32>
    %58 = tpu.reciprocal %57 {approx = true} : vector<4x8x1xf32> -> vector<4x8x1xf32>
    %c0_57 = arith.constant 0 : index
    %c0_58 = arith.constant 0 : index
    %c0_59 = arith.constant 0 : index
    %59 = vector.load %arg22[%c0_57, %c0_58, %c0_59] : memref<4x8x8xf32, #tpu.memory_space<vmem>>, vector<4x8x8xf32>
    %60 = vector.broadcast %58 : vector<4x8x1xf32> to vector<4x8x8xf32>
    %61 = arith.mulf %59, %60 : vector<4x8x8xf32>
    %62 = arith.truncf %61 : vector<4x8x8xf32> to vector<4x8x8xbf16>
    %cst_60 = arith.constant 0.000000e+00 : f32
    %63 = vector.broadcast %cst_60 : f32 to vector<8x32xf32>
    %64 = vector.extract_strided_slice %62 {offsets = [0, 0, 0], sizes = [1, 8, 8], strides = [1, 1, 1]} : vector<4x8x8xbf16> to vector<1x8x8xbf16>
    %65 = vector.shape_cast %64 : vector<1x8x8xbf16> to vector<8x8xbf16>
    %c0_61 = arith.constant 0 : index
    %c0_62 = arith.constant 0 : index
    %c0_63 = arith.constant 0 : index
    %66 = vector.load %arg7[%c0_61, %c0_62, %c0_63] : memref<4x8x32xbf16, #tpu.memory_space<vmem>>, vector<1x8x32xbf16>
    %67 = vector.shape_cast %66 : vector<1x8x32xbf16> to vector<8x32xbf16>
    %cst_64 = arith.constant dense<0.000000e+00> : vector<8x32xf32>
    %68 = tpu.matmul %65, %67, %cst_64 {dimension_numbers = #tpu.dot_dimension_numbers<[1], [0], [0], [1], [0, 0, 1, 1], [], []>} : vector<8x8xbf16>, vector<8x32xbf16>, vector<8x32xf32> -> vector<8x32xf32>
    %69 = arith.addf %63, %68 : vector<8x32xf32>
    %70 = vector.extract_strided_slice %62 {offsets = [1, 0, 0], sizes = [1, 8, 8], strides = [1, 1, 1]} : vector<4x8x8xbf16> to vector<1x8x8xbf16>
    %71 = vector.shape_cast %70 : vector<1x8x8xbf16> to vector<8x8xbf16>
    %c1_65 = arith.constant 1 : index
    %c0_66 = arith.constant 0 : index
    %c0_67 = arith.constant 0 : index
    %72 = vector.load %arg7[%c1_65, %c0_66, %c0_67] : memref<4x8x32xbf16, #tpu.memory_space<vmem>>, vector<1x8x32xbf16>
    %73 = vector.shape_cast %72 : vector<1x8x32xbf16> to vector<8x32xbf16>
    %cst_68 = arith.constant dense<0.000000e+00> : vector<8x32xf32>
    %74 = tpu.matmul %71, %73, %cst_68 {dimension_numbers = #tpu.dot_dimension_numbers<[1], [0], [0], [1], [0, 0, 1, 1], [], []>} : vector<8x8xbf16>, vector<8x32xbf16>, vector<8x32xf32> -> vector<8x32xf32>
    %75 = arith.addf %69, %74 : vector<8x32xf32>
    %76 = vector.extract_strided_slice %62 {offsets = [2, 0, 0], sizes = [1, 8, 8], strides = [1, 1, 1]} : vector<4x8x8xbf16> to vector<1x8x8xbf16>
    %77 = vector.shape_cast %76 : vector<1x8x8xbf16> to vector<8x8xbf16>
    %c2_69 = arith.constant 2 : index
    %c0_70 = arith.constant 0 : index
    %c0_71 = arith.constant 0 : index
    %78 = vector.load %arg7[%c2_69, %c0_70, %c0_71] : memref<4x8x32xbf16, #tpu.memory_space<vmem>>, vector<1x8x32xbf16>
    %79 = vector.shape_cast %78 : vector<1x8x32xbf16> to vector<8x32xbf16>
    %cst_72 = arith.constant dense<0.000000e+00> : vector<8x32xf32>
    %80 = tpu.matmul %77, %79, %cst_72 {dimension_numbers = #tpu.dot_dimension_numbers<[1], [0], [0], [1], [0, 0, 1, 1], [], []>} : vector<8x8xbf16>, vector<8x32xbf16>, vector<8x32xf32> -> vector<8x32xf32>
    %81 = arith.addf %75, %80 : vector<8x32xf32>
    %82 = vector.extract_strided_slice %62 {offsets = [3, 0, 0], sizes = [1, 8, 8], strides = [1, 1, 1]} : vector<4x8x8xbf16> to vector<1x8x8xbf16>
    %83 = vector.shape_cast %82 : vector<1x8x8xbf16> to vector<8x8xbf16>
    %c3_73 = arith.constant 3 : index
    %c0_74 = arith.constant 0 : index
    %c0_75 = arith.constant 0 : index
    %84 = vector.load %arg7[%c3_73, %c0_74, %c0_75] : memref<4x8x32xbf16, #tpu.memory_space<vmem>>, vector<1x8x32xbf16>
    %85 = vector.shape_cast %84 : vector<1x8x32xbf16> to vector<8x32xbf16>
    %cst_76 = arith.constant dense<0.000000e+00> : vector<8x32xf32>
    %86 = tpu.matmul %83, %85, %cst_76 {dimension_numbers = #tpu.dot_dimension_numbers<[1], [0], [0], [1], [0, 0, 1, 1], [], []>} : vector<8x8xbf16>, vector<8x32xbf16>, vector<8x32xf32> -> vector<8x32xf32>
    %87 = arith.addf %81, %86 : vector<8x32xf32>
    %88 = arith.addf %5, %87 : vector<8x32xf32>
    %c0_77 = arith.constant 0 : index
    %c0_78 = arith.constant 0 : index
    %89 = vector.load %arg12[%c0_77, %c0_78] : memref<1x32xf32, #tpu.memory_space<vmem>>, vector<1x32xf32>
    %c0_79 = arith.constant 0 : index
    %c0_80 = arith.constant 0 : index
    %90 = vector.load %arg13[%c0_79, %c0_80] : memref<1x32xf32, #tpu.memory_space<vmem>>, vector<1x32xf32>
    %cst_81 = arith.constant dense<0.000000e+00> : vector<8xf32>
    %91 = vector.multi_reduction <add>, %88, %cst_81 [1] : vector<8x32xf32> to vector<8xf32>
    %92 = vector.shape_cast %91 : vector<8xf32> to vector<8x1xf32>
    %cst_82 = arith.constant 3.200000e+01 : f32
    %93 = vector.broadcast %cst_82 : f32 to vector<8x1xf32>
    %94 = arith.divf %92, %93 : vector<8x1xf32>
    %95 = vector.broadcast %94 : vector<8x1xf32> to vector<8x32xf32>
    %96 = arith.subf %88, %95 : vector<8x32xf32>
    %97 = vector.broadcast %94 : vector<8x1xf32> to vector<8x32xf32>
    %98 = arith.subf %88, %97 : vector<8x32xf32>
    %99 = arith.mulf %96, %98 : vector<8x32xf32>
    %cst_83 = arith.constant dense<0.000000e+00> : vector<8xf32>
    %100 = vector.multi_reduction <add>, %99, %cst_83 [1] : vector<8x32xf32> to vector<8xf32>
    %101 = vector.shape_cast %100 : vector<8xf32> to vector<8x1xf32>
    %cst_84 = arith.constant 3.200000e+01 : f32
    %102 = vector.broadcast %cst_84 : f32 to vector<8x1xf32>
    %103 = arith.divf %101, %102 : vector<8x1xf32>
    %104 = vector.broadcast %94 : vector<8x1xf32> to vector<8x32xf32>
    %105 = arith.subf %88, %104 : vector<8x32xf32>
    %cst_85 = arith.constant 9.99999974E-6 : f32
    %106 = vector.broadcast %cst_85 : f32 to vector<8x1xf32>
    %107 = arith.addf %103, %106 : vector<8x1xf32>
    %108 = math.rsqrt %107 : vector<8x1xf32>
    %109 = vector.broadcast %108 : vector<8x1xf32> to vector<8x32xf32>
    %110 = arith.mulf %105, %109 : vector<8x32xf32>
    %111 = vector.broadcast %89 : vector<1x32xf32> to vector<8x32xf32>
    %112 = arith.mulf %110, %111 : vector<8x32xf32>
    %113 = vector.broadcast %90 : vector<1x32xf32> to vector<8x32xf32>
    %114 = arith.addf %112, %113 : vector<8x32xf32>
    %115 = arith.truncf %114 : vector<8x32xf32> to vector<8x32xbf16>
    %cst_86 = arith.constant 0.000000e+00 : f32
    %116 = vector.broadcast %cst_86 : f32 to vector<8x32xf32>
    %c0_87 = arith.constant 0 : index
    %c0_88 = arith.constant 0 : index
    %117 = vector.load %arg8[%c0_87, %c0_88] : memref<32x128xbf16, #tpu.memory_space<vmem>>, vector<32x128xbf16>
    %cst_89 = arith.constant dense<0.000000e+00> : vector<8x128xf32>
    %118 = tpu.matmul %115, %117, %cst_89 {dimension_numbers = #tpu.dot_dimension_numbers<[1], [0], [0], [1], [0, 0, 1, 1], [], []>} : vector<8x32xbf16>, vector<32x128xbf16>, vector<8x128xf32> -> vector<8x128xf32>
    %c0_90 = arith.constant 0 : index
    %c0_91 = arith.constant 0 : index
    %119 = vector.load %arg9[%c0_90, %c0_91] : memref<1x128xf32, #tpu.memory_space<vmem>>, vector<1x128xf32>
    %120 = vector.broadcast %119 : vector<1x128xf32> to vector<8x128xf32>
    %121 = arith.addf %118, %120 : vector<8x128xf32>
    %cst_92 = arith.constant 5.000000e-01 : f32
    %122 = vector.broadcast %cst_92 : f32 to vector<8x128xf32>
    %123 = arith.mulf %122, %121 : vector<8x128xf32>
    %cst_93 = arith.constant 0.707106769 : f32
    %124 = vector.broadcast %cst_93 : f32 to vector<8x128xf32>
    %125 = arith.mulf %121, %124 : vector<8x128xf32>
    %126 = math.erf %125 : vector<8x128xf32>
    %cst_94 = arith.constant 1.000000e+00 : f32
    %127 = vector.broadcast %cst_94 : f32 to vector<8x128xf32>
    %128 = arith.addf %127, %126 : vector<8x128xf32>
    %129 = arith.mulf %123, %128 : vector<8x128xf32>
    %130 = arith.truncf %129 : vector<8x128xf32> to vector<8x128xbf16>
    %c0_95 = arith.constant 0 : index
    %c0_96 = arith.constant 0 : index
    %131 = vector.load %arg10[%c0_95, %c0_96] : memref<128x32xbf16, #tpu.memory_space<vmem>>, vector<128x32xbf16>
    %cst_97 = arith.constant dense<0.000000e+00> : vector<8x32xf32>
    %132 = tpu.matmul %130, %131, %cst_97 {dimension_numbers = #tpu.dot_dimension_numbers<[1], [0], [0], [1], [0, 0, 1, 1], [], []>} : vector<8x128xbf16>, vector<128x32xbf16>, vector<8x32xf32> -> vector<8x32xf32>
    %133 = arith.addf %116, %132 : vector<8x32xf32>
    %c0_98 = arith.constant 0 : index
    %c0_99 = arith.constant 0 : index
    %134 = vector.load %arg11[%c0_98, %c0_99] : memref<1x32xf32, #tpu.memory_space<vmem>>, vector<1x32xf32>
    %135 = vector.broadcast %134 : vector<1x32xf32> to vector<8x32xf32>
    %136 = arith.addf %133, %135 : vector<8x32xf32>
    %137 = arith.addf %114, %136 : vector<8x32xf32>
    %c0_100 = arith.constant 0 : index
    %c0_101 = arith.constant 0 : index
    %138 = vector.load %arg14[%c0_100, %c0_101] : memref<1x32xf32, #tpu.memory_space<vmem>>, vector<1x32xf32>
    %c0_102 = arith.constant 0 : index
    %c0_103 = arith.constant 0 : index
    %139 = vector.load %arg15[%c0_102, %c0_103] : memref<1x32xf32, #tpu.memory_space<vmem>>, vector<1x32xf32>
    %cst_104 = arith.constant dense<0.000000e+00> : vector<8xf32>
    %140 = vector.multi_reduction <add>, %137, %cst_104 [1] : vector<8x32xf32> to vector<8xf32>
    %141 = vector.shape_cast %140 : vector<8xf32> to vector<8x1xf32>
    %cst_105 = arith.constant 3.200000e+01 : f32
    %142 = vector.broadcast %cst_105 : f32 to vector<8x1xf32>
    %143 = arith.divf %141, %142 : vector<8x1xf32>
    %144 = vector.broadcast %143 : vector<8x1xf32> to vector<8x32xf32>
    %145 = arith.subf %137, %144 : vector<8x32xf32>
    %146 = vector.broadcast %143 : vector<8x1xf32> to vector<8x32xf32>
    %147 = arith.subf %137, %146 : vector<8x32xf32>
    %148 = arith.mulf %145, %147 : vector<8x32xf32>
    %cst_106 = arith.constant dense<0.000000e+00> : vector<8xf32>
    %149 = vector.multi_reduction <add>, %148, %cst_106 [1] : vector<8x32xf32> to vector<8xf32>
    %150 = vector.shape_cast %149 : vector<8xf32> to vector<8x1xf32>
    %cst_107 = arith.constant 3.200000e+01 : f32
    %151 = vector.broadcast %cst_107 : f32 to vector<8x1xf32>
    %152 = arith.divf %150, %151 : vector<8x1xf32>
    %153 = vector.broadcast %143 : vector<8x1xf32> to vector<8x32xf32>
    %154 = arith.subf %137, %153 : vector<8x32xf32>
    %cst_108 = arith.constant 9.99999974E-6 : f32
    %155 = vector.broadcast %cst_108 : f32 to vector<8x1xf32>
    %156 = arith.addf %152, %155 : vector<8x1xf32>
    %157 = math.rsqrt %156 : vector<8x1xf32>
    %158 = vector.broadcast %157 : vector<8x1xf32> to vector<8x32xf32>
    %159 = arith.mulf %154, %158 : vector<8x32xf32>
    %160 = vector.broadcast %138 : vector<1x32xf32> to vector<8x32xf32>
    %161 = arith.mulf %159, %160 : vector<8x32xf32>
    %162 = vector.broadcast %139 : vector<1x32xf32> to vector<8x32xf32>
    %163 = arith.addf %161, %162 : vector<8x32xf32>
    %c0_109 = arith.constant 0 : index
    %c0_110 = arith.constant 0 : index
    %c0_111 = arith.constant 0 : index
    %164 = vector.load %arg16[%c0_109, %c0_110, %c0_111] : memref<1x8x32xf32, #tpu.memory_space<vmem>>, vector<1x8x32xf32>
    %165 = vector.shape_cast %164 : vector<1x8x32xf32> to vector<8x32xf32>
    %166 = vector.shape_cast %163 : vector<8x32xf32> to vector<1x8x32xf32>
    tpu.vector_store %arg16[%c0_109, %c0_110, %c0_111], %166 {strides = array<i32>} : memref<1x8x32xf32, #tpu.memory_space<vmem>>, vector<1x8x32xf32>,
    return
  }
  func.func @transform_0(%arg0: i32, %arg1: i32) -> (i32, i32, i32) {
    %c0_i32 = arith.constant 0 : i32
    %c0_i32_0 = arith.constant 0 : i32
    %c0_i32_1 = arith.constant 0 : i32
    return %arg0, %c0_i32, %c0_i32_0 : i32, i32, i32
  }
  func.func @transform_1(%arg0: i32, %arg1: i32) -> (i32, i32, i32) {
    %c0_i32 = arith.constant 0 : i32
    %c0_i32_0 = arith.constant 0 : i32
    return %arg0, %arg1, %c0_i32 : i32, i32, i32
  }
  func.func @transform_2(%arg0: i32, %arg1: i32) -> (i32, i32, i32) {
    %c0_i32 = arith.constant 0 : i32
    %c0_i32_0 = arith.constant 0 : i32
    %c0_i32_1 = arith.constant 0 : i32
    %c0_i32_2 = arith.constant 0 : i32
    return %c0_i32, %c0_i32_0, %c0_i32_1 : i32, i32, i32
  }
  func.func @transform_3(%arg0: i32, %arg1: i32) -> (i32, i32, i32) {
    %c0_i32 = arith.constant 0 : i32
    %c0_i32_0 = arith.constant 0 : i32
    %c0_i32_1 = arith.constant 0 : i32
    %c0_i32_2 = arith.constant 0 : i32
    return %c0_i32, %c0_i32_0, %c0_i32_1 : i32, i32, i32
  }
  func.func @transform_4(%arg0: i32, %arg1: i32) -> (i32, i32, i32) {
    %c0_i32 = arith.constant 0 : i32
    %c0_i32_0 = arith.constant 0 : i32
    %c0_i32_1 = arith.constant 0 : i32
    %c0_i32_2 = arith.constant 0 : i32
    return %c0_i32, %c0_i32_0, %c0_i32_1 : i32, i32, i32
  }
  func.func @transform_5(%arg0: i32, %arg1: i32) -> (i32, i32, i32) {
    %c0_i32 = arith.constant 0 : i32
    %c0_i32_0 = arith.constant 0 : i32
    %c0_i32_1 = arith.constant 0 : i32
    %c0_i32_2 = arith.constant 0 : i32
    return %c0_i32, %c0_i32_0, %c0_i32_1 : i32, i32, i32
  }
  func.func @transform_6(%arg0: i32, %arg1: i32) -> (i32, i32) {
    %c0_i32 = arith.constant 0 : i32
    %c0_i32_0 = arith.constant 0 : i32
    %c0_i32_1 = arith.constant 0 : i32
    return %c0_i32, %c0_i32_0 : i32, i32
  }
  func.func @transform_7(%arg0: i32, %arg1: i32) -> (i32, i32) {
    %c0_i32 = arith.constant 0 : i32
    %c0_i32_0 = arith.constant 0 : i32
    %c0_i32_1 = arith.constant 0 : i32
    return %c0_i32, %c0_i32_0 : i32, i32
  }
  func.func @transform_8(%arg0: i32, %arg1: i32) -> (i32, i32) {
    %c0_i32 = arith.constant 0 : i32
    %c0_i32_0 = arith.constant 0 : i32
    %c0_i32_1 = arith.constant 0 : i32
    return %c0_i32, %c0_i32_0 : i32, i32
  }
  func.func @transform_9(%arg0: i32, %arg1: i32) -> (i32, i32) {
    %c0_i32 = arith.constant 0 : i32
    %c0_i32_0 = arith.constant 0 : i32
    %c0_i32_1 = arith.constant 0 : i32
    return %c0_i32, %c0_i32_0 : i32, i32
  }
  func.func @transform_10(%arg0: i32, %arg1: i32) -> (i32, i32) {
    %c0_i32 = arith.constant 0 : i32
    %c0_i32_0 = arith.constant 0 : i32
    %c0_i32_1 = arith.constant 0 : i32
    return %c0_i32, %c0_i32_0 : i32, i32
  }
  func.func @transform_11(%arg0: i32, %arg1: i32) -> (i32, i32) {
    %c0_i32 = arith.constant 0 : i32
    %c0_i32_0 = arith.constant 0 : i32
    %c0_i32_1 = arith.constant 0 : i32
    return %c0_i32, %c0_i32_0 : i32, i32
  }
  func.func @transform_12(%arg0: i32, %arg1: i32) -> (i32, i32) {
    %c0_i32 = arith.constant 0 : i32
    %c0_i32_0 = arith.constant 0 : i32
    %c0_i32_1 = arith.constant 0 : i32
    return %c0_i32, %c0_i32_0 : i32, i32
  }
  func.func @transform_13(%arg0: i32, %arg1: i32) -> (i32, i32) {
    %c0_i32 = arith.constant 0 : i32
    %c0_i32_0 = arith.constant 0 : i32
    %c0_i32_1 = arith.constant 0 : i32
    return %c0_i32, %c0_i32_0 : i32, i32
  }
  func.func @transform_14(%arg0: i32, %arg1: i32) -> (i32, i32, i32) {
    %c0_i32 = arith.constant 0 : i32
    %c0_i32_0 = arith.constant 0 : i32
    return %arg0, %arg1, %c0_i32 : i32, i32, i32
  }
}

</mosaic_0001>

<llo_original>
// kernel: tpu_custom_call.1
$region0: #{tpu_custom_call.1}
  #allocation0 [shape = 'u32[]', space=smem, size = 0x4, offset = 0x4, fixed_abs, tag = 'smem constant byte address 0x4 - core index']
  #allocation1 [shape = 'u32[72,128]{1,0:T(1,128)}', space=vmem, size = 0x9000, scoped, tag = 'internal scratch']
  #allocation2 [shape = 'bf16[4,8,8]{2,1,0:T(8,128)(2,1)}', space=vmem, size = 0x2000, scoped, tag = 'scratch operand']
  #allocation3 [shape = 'bf16[4,8,8]{2,1,0:T(8,128)(2,1)}', space=vmem, size = 0x2000, scoped, tag = 'scratch operand']
  #allocation4 [shape = 'bf16[4,8,8]{2,1,0:T(8,128)(2,1)}', space=vmem, size = 0x2000, scoped, tag = 'scratch operand']
  #allocation5 [shape = 'f32[4,8,1]{2,1,0:T(8,128)}', space=vmem, size = 0x4000, scoped, tag = 'scratch operand']
  #allocation6 [shape = 'f32[4,8,1]{2,1,0:T(8,128)}', space=vmem, size = 0x4000, scoped, tag = 'scratch operand']
  #allocation7 [shape = 'f32[4,8,8]{2,1,0:T(8,128)}', space=vmem, size = 0x4000, scoped, tag = 'scratch operand']
  %s0 = inlined_call_operand.vmem [shape: f32[2,8,32], index: 0, kind: input, shape index: {}]
  %s1 = inlined_call_operand.vmem [shape: f32[2,8,32], index: 1, kind: input, shape index: {}]
  %s2 = inlined_call_operand.vmem [shape: bf16[4,32,8], index: 2, kind: input, shape index: {}]
  %s3 = inlined_call_operand.vmem [shape: bf16[4,32,8], index: 3, kind: input, shape index: {}]
  %s4 = inlined_call_operand.vmem [shape: bf16[4,32,8], index: 4, kind: input, shape index: {}]
  %s5 = inlined_call_operand.vmem [shape: bf16[4,8,32], index: 5, kind: input, shape index: {}]
  %s6 = inlined_call_operand.vmem [shape: bf16[32,128], index: 6, kind: input, shape index: {}]
  %s7 = inlined_call_operand.vmem [shape: f32[1,128], index: 7, kind: input, shape index: {}]
  %s8 = inlined_call_operand.vmem [shape: bf16[128,32], index: 8, kind: input, shape index: {}]
  %s9 = inlined_call_operand.vmem [shape: f32[1,32], index: 9, kind: input, shape index: {}]
  %s10 = inlined_call_operand.vmem [shape: f32[1,32], index: 10, kind: input, shape index: {}]
  %s11 = inlined_call_operand.vmem [shape: f32[1,32], index: 11, kind: input, shape index: {}]
  %s12 = inlined_call_operand.vmem [shape: f32[1,32], index: 12, kind: input, shape index: {}]
  %s13 = inlined_call_operand.vmem [shape: f32[1,32], index: 13, kind: input, shape index: {}]
  %s14 = inlined_call_operand.hbm [shape: f32[2,8,32], index: 14, kind: output, shape index: {}]
  %s15 = sld [smem:[#allocation0]]
  $region100: #{tpu_custom_call.1} parent=0
    _
  %s17 = ssub.s32 1, %s15
  %s18 = scalar_select 0, %s17, %s15
  $region1: #{tpu_custom_call.1} parent=0
    #allocation8 [shape = 'u8[8192]{0}', space=vmem, size = 0x2000, scoped, tag = 'output window, operand 0']
    #allocation9 [shape = 's32[2]{0}', space=sflag, size = 0x8, scoped, tag = 'scoped memory for tpu_custom_call.1']
    %19 = vsyncpa [#allocation9], 0
    %s20 = scalar_lea.sflag [#allocation9], 1
    %21 = vsyncpa %s20, 0
    loop: start=0, step=1, limit=4
    $region2: #{tpu_custom_call.1} parent=1 // loop_pre_header
      _
    $region3: #{tpu_custom_call.1} parent=1 // loop_header
      %s23 = sphi 0, %s27
      %p24 = scmp.ge.s32.totalorder %s23, 4
      %s30 = sphi 0, %s42
      %s31 = sphi 0, %s38
      %s32 = sphi 0, %s30
      %s33 = sphi 0, %s31
      %s34 = sphi 0, %s32
      %s35 = sphi 0, %s33
      %s45 = sphi 0, %s47
      %s48 = sphi 0, %s45
      %s49 = sphi 0, %s48
      %s65 = sphi 0, %s49
      %s73 = sphi 0, %s75
      %s76 = sphi 0, %s73
      %s77 = sphi 0, %s76
      %s93 = sphi 0, %s77
      %s97 = sphi 0, %s97
      %s99 = sphi 0, %s97
      %s100 = sphi 0, %s99
      %s114 = sphi 0, %s100
      %s118 = sphi 0, %s118
      %s120 = sphi 0, %s118
      %s121 = sphi 0, %s120
      %s135 = sphi 0, %s121
      %s139 = sphi 0, %s139
      %s141 = sphi 0, %s139
      %s142 = sphi 0, %s141
      %s156 = sphi 0, %s142
      %s160 = sphi 0, %s160
      %s162 = sphi 0, %s160
      %s163 = sphi 0, %s162
      %s177 = sphi 0, %s163
      %s181 = sphi 0, %s181
      %s183 = sphi 0, %s181
      %s184 = sphi 0, %s183
      %s198 = sphi 0, %s184
      %s202 = sphi 0, %s202
      %s204 = sphi 0, %s202
      %s205 = sphi 0, %s204
      %s219 = sphi 0, %s205
      %s223 = sphi 0, %s223
      %s225 = sphi 0, %s223
      %s226 = sphi 0, %s225
      %s240 = sphi 0, %s226
      %s244 = sphi 0, %s244
      %s246 = sphi 0, %s244
      %s247 = sphi 0, %s246
      %s261 = sphi 0, %s247
      %s265 = sphi 0, %s265
      %s267 = sphi 0, %s265
      %s268 = sphi 0, %s267
      %s282 = sphi 0, %s268
      %s286 = sphi 0, %s286
      %s288 = sphi 0, %s286
      %s289 = sphi 0, %s288
      %s303 = sphi 0, %s289
      %s307 = sphi 0, %s307
      %s309 = sphi 0, %s307
      %s310 = sphi 0, %s309
      %s324 = sphi 0, %s310
      %s328 = sphi 0, %s328
      %s330 = sphi 0, %s328
      %s331 = sphi 0, %s330
      %s345 = sphi 0, %s331
      %s353 = sphi 0, %s355
      %s356 = sphi 0, %s353
      %s357 = sphi 0, %s356
      %s373 = sphi 0, %s357
    $region4: #{tpu_custom_call.1} parent=1 // loop_header_branch
      %26 = sbr.rel (%p24) target = $region8
    $region5: #{tpu_custom_call.1} parent=1 // loop_body
      %s28 = ssub.s32 %s23, 1
      %s29 = ssub.s32 %s23, 2
      %s36 = sadd.s32 1, %s31
      %p37 = scmp.ge.s32.totalorder %s36, 1
      %s38 = scalar_select %p37, 0, %s36
      %s39 = sadd.s32 1, %s30
      %s40 = scalar_select %p37, %s39, %s30
      %p41 = scmp.ge.s32.totalorder %s40, 2
      %s42 = scalar_select %p41, 0, %s40
      %s43 = ssub.s32 %s30, %s42
      %p44 = scmp.eq.s32.totalorder %s43, 0
      %s46 = sadd.s32 %s45, 1
      %s47 = scalar_select %p44, %s45, %s46
      %p50 = pneg %p44
      %p51 = scmp.eq.s32.totalorder %s23, 1
      %p52 = por %p50, %p51
      %p53 = scmp.ne.s32.totalorder %s45, %s48
      %p54 = scmp.eq.s32.totalorder %s23, 0
      %p55 = por %p53, %p54
      %p56 = scmp.ne.s32.totalorder %s45, %s48
      %p57 = scmp.eq.s32.totalorder %s28, 1
      %p58 = por %p56, %p57
      %p59 = scmp.ne.s32.totalorder %s48, %s49
      %p60 = scmp.eq.s32.totalorder %s28, 0
      %p61 = por %p59, %p60
      %p62 = scmp.ne.s32.totalorder %s48, %s49
      %p63 = scmp.eq.s32.totalorder %s29, 1
      %p64 = por %p62, %p63
      %p66 = scmp.ne.s32.totalorder %s49, %s65
      %p67 = scmp.eq.s32.totalorder %s29, 0
      %p68 = por %p66, %p67
      %s69 = ssub.s32 %s30, %s42
      %s70 = ssub.s32 %s31, %s38
      %s71 = sor.u32 %s69, %s70
      %p72 = scmp.eq.s32.totalorder %s71, 0
      %s74 = sadd.s32 %s73, 1
      %s75 = scalar_select %p72, %s73, %s74
      %p78 = pneg %p72
      %p79 = scmp.eq.s32.totalorder %s23, 1
      %p80 = por %p78, %p79
      %p81 = scmp.ne.s32.totalorder %s73, %s76
      %p82 = scmp.eq.s32.totalorder %s23, 0
      %p83 = por %p81, %p82
      %p84 = scmp.ne.s32.totalorder %s73, %s76
      %p85 = scmp.eq.s32.totalorder %s28, 1
      %p86 = por %p84, %p85
      %p87 = scmp.ne.s32.totalorder %s76, %s77
      %p88 = scmp.eq.s32.totalorder %s28, 0
      %p89 = por %p87, %p88
      %p90 = scmp.ne.s32.totalorder %s76, %s77
      %p91 = scmp.eq.s32.totalorder %s29, 1
      %p92 = por %p90, %p91
      %p94 = scmp.ne.s32.totalorder %s77, %s93
      %p95 = scmp.eq.s32.totalorder %s29, 0
      %p96 = por %p94, %p95
      %s98 = sadd.s32 %s97, 1
      %p101 = scmp.eq.s32.totalorder %s23, 1
      %p102 = scmp.ne.s32.totalorder %s97, %s99
      %p103 = scmp.eq.s32.totalorder %s23, 0
      %p104 = por %p102, %p103
      %p105 = scmp.ne.s32.totalorder %s97, %s99
      %p106 = scmp.eq.s32.totalorder %s28, 1
      %p107 = por %p105, %p106
      %p108 = scmp.ne.s32.totalorder %s99, %s100
      %p109 = scmp.eq.s32.totalorder %s28, 0
      %p110 = por %p108, %p109
      %p111 = scmp.ne.s32.totalorder %s99, %s100
      %p112 = scmp.eq.s32.totalorder %s29, 1
      %p113 = por %p111, %p112
      %p115 = scmp.ne.s32.totalorder %s100, %s114
      %p116 = scmp.eq.s32.totalorder %s29, 0
      %p117 = por %p115, %p116
      %s119 = sadd.s32 %s118, 1
      %p122 = scmp.eq.s32.totalorder %s23, 1
      %p123 = scmp.ne.s32.totalorder %s118, %s120
      %p124 = scmp.eq.s32.totalorder %s23, 0
      %p125 = por %p123, %p124
      %p126 = scmp.ne.s32.totalorder %s118, %s120
      %p127 = scmp.eq.s32.totalorder %s28, 1
      %p128 = por %p126, %p127
      %p129 = scmp.ne.s32.totalorder %s120, %s121
      %p130 = scmp.eq.s32.totalorder %s28, 0
      %p131 = por %p129, %p130
      %p132 = scmp.ne.s32.totalorder %s120, %s121
      %p133 = scmp.eq.s32.totalorder %s29, 1
      %p134 = por %p132, %p133
      %p136 = scmp.ne.s32.totalorder %s121, %s135
      %p137 = scmp.eq.s32.totalorder %s29, 0
      %p138 = por %p136, %p137
      %s140 = sadd.s32 %s139, 1
      %p143 = scmp.eq.s32.totalorder %s23, 1
      %p144 = scmp.ne.s32.totalorder %s139, %s141
      %p145 = scmp.eq.s32.totalorder %s23, 0
      %p146 = por %p144, %p145
      %p147 = scmp.ne.s32.totalorder %s139, %s141
      %p148 = scmp.eq.s32.totalorder %s28, 1
      %p149 = por %p147, %p148
      %p150 = scmp.ne.s32.totalorder %s141, %s142
      %p151 = scmp.eq.s32.totalorder %s28, 0
      %p152 = por %p150, %p151
      %p153 = scmp.ne.s32.totalorder %s141, %s142
      %p154 = scmp.eq.s32.totalorder %s29, 1
      %p155 = por %p153, %p154
      %p157 = scmp.ne.s32.totalorder %s142, %s156
      %p158 = scmp.eq.s32.totalorder %s29, 0
      %p159 = por %p157, %p158
      %s161 = sadd.s32 %s160, 1
      %p164 = scmp.eq.s32.totalorder %s23, 1
      %p165 = scmp.ne.s32.totalorder %s160, %s162
      %p166 = scmp.eq.s32.totalorder %s23, 0
      %p167 = por %p165, %p166
      %p168 = scmp.ne.s32.totalorder %s160, %s162
      %p169 = scmp.eq.s32.totalorder %s28, 1
      %p170 = por %p168, %p169
      %p171 = scmp.ne.s32.totalorder %s162, %s163
      %p172 = scmp.eq.s32.totalorder %s28, 0
      %p173 = por %p171, %p172
      %p174 = scmp.ne.s32.totalorder %s162, %s163
      %p175 = scmp.eq.s32.totalorder %s29, 1
      %p176 = por %p174, %p175
      %p178 = scmp.ne.s32.totalorder %s163, %s177
      %p179 = scmp.eq.s32.totalorder %s29, 0
      %p180 = por %p178, %p179
      %s182 = sadd.s32 %s181, 1
      %p185 = scmp.eq.s32.totalorder %s23, 1
      %p186 = scmp.ne.s32.totalorder %s181, %s183
      %p187 = scmp.eq.s32.totalorder %s23, 0
      %p188 = por %p186, %p187
      %p189 = scmp.ne.s32.totalorder %s181, %s183
      %p190 = scmp.eq.s32.totalorder %s28, 1
      %p191 = por %p189, %p190
      %p192 = scmp.ne.s32.totalorder %s183, %s184
      %p193 = scmp.eq.s32.totalorder %s28, 0
      %p194 = por %p192, %p193
      %p195 = scmp.ne.s32.totalorder %s183, %s184
      %p196 = scmp.eq.s32.totalorder %s29, 1
      %p197 = por %p195, %p196
      %p199 = scmp.ne.s32.totalorder %s184, %s198
      %p200 = scmp.eq.s32.totalorder %s29, 0
      %p201 = por %p199, %p200
      %s203 = sadd.s32 %s202, 1
      %p206 = scmp.eq.s32.totalorder %s23, 1
      %p207 = scmp.ne.s32.totalorder %s202, %s204
      %p208 = scmp.eq.s32.totalorder %s23, 0
      %p209 = por %p207, %p208
      %p210 = scmp.ne.s32.totalorder %s202, %s204
      %p211 = scmp.eq.s32.totalorder %s28, 1
      %p212 = por %p210, %p211
      %p213 = scmp.ne.s32.totalorder %s204, %s205
      %p214 = scmp.eq.s32.totalorder %s28, 0
      %p215 = por %p213, %p214
      %p216 = scmp.ne.s32.totalorder %s204, %s205
      %p217 = scmp.eq.s32.totalorder %s29, 1
      %p218 = por %p216, %p217
      %p220 = scmp.ne.s32.totalorder %s205, %s219
      %p221 = scmp.eq.s32.totalorder %s29, 0
      %p222 = por %p220, %p221
      %s224 = sadd.s32 %s223, 1
      %p227 = scmp.eq.s32.totalorder %s23, 1
      %p228 = scmp.ne.s32.totalorder %s223, %s225
      %p229 = scmp.eq.s32.totalorder %s23, 0
      %p230 = por %p228, %p229
      %p231 = scmp.ne.s32.totalorder %s223, %s225
      %p232 = scmp.eq.s32.totalorder %s28, 1
      %p233 = por %p231, %p232
      %p234 = scmp.ne.s32.totalorder %s225, %s226
      %p235 = scmp.eq.s32.totalorder %s28, 0
      %p236 = por %p234, %p235
      %p237 = scmp.ne.s32.totalorder %s225, %s226
      %p238 = scmp.eq.s32.totalorder %s29, 1
      %p239 = por %p237, %p238
      %p241 = scmp.ne.s32.totalorder %s226, %s240
      %p242 = scmp.eq.s32.totalorder %s29, 0
      %p243 = por %p241, %p242
      %s245 = sadd.s32 %s244, 1
      %p248 = scmp.eq.s32.totalorder %s23, 1
      %p249 = scmp.ne.s32.totalorder %s244, %s246
      %p250 = scmp.eq.s32.totalorder %s23, 0
      %p251 = por %p249, %p250
      %p252 = scmp.ne.s32.totalorder %s244, %s246
      %p253 = scmp.eq.s32.totalorder %s28, 1
      %p254 = por %p252, %p253
      %p255 = scmp.ne.s32.totalorder %s246, %s247
      %p256 = scmp.eq.s32.totalorder %s28, 0
      %p257 = por %p255, %p256
      %p258 = scmp.ne.s32.totalorder %s246, %s247
      %p259 = scmp.eq.s32.totalorder %s29, 1
      %p260 = por %p258, %p259
      %p262 = scmp.ne.s32.totalorder %s247, %s261
      %p263 = scmp.eq.s32.totalorder %s29, 0
      %p264 = por %p262, %p263
      %s266 = sadd.s32 %s265, 1
      %p269 = scmp.eq.s32.totalorder %s23, 1
      %p270 = scmp.ne.s32.totalorder %s265, %s267
      %p271 = scmp.eq.s32.totalorder %s23, 0
      %p272 = por %p270, %p271
      %p273 = scmp.ne.s32.totalorder %s265, %s267
      %p274 = scmp.eq.s32.totalorder %s28, 1
      %p275 = por %p273, %p274
      %p276 = scmp.ne.s32.totalorder %s267, %s268
      %p277 = scmp.eq.s32.totalorder %s28, 0
      %p278 = por %p276, %p277
      %p279 = scmp.ne.s32.totalorder %s267, %s268
      %p280 = scmp.eq.s32.totalorder %s29, 1
      %p281 = por %p279, %p280
      %p283 = scmp.ne.s32.totalorder %s268, %s282
      %p284 = scmp.eq.s32.totalorder %s29, 0
      %p285 = por %p283, %p284
      %s287 = sadd.s32 %s286, 1
      %p290 = scmp.eq.s32.totalorder %s23, 1
      %p291 = scmp.ne.s32.totalorder %s286, %s288
      %p292 = scmp.eq.s32.totalorder %s23, 0
      %p293 = por %p291, %p292
      %p294 = scmp.ne.s32.totalorder %s286, %s288
      %p295 = scmp.eq.s32.totalorder %s28, 1
      %p296 = por %p294, %p295
      %p297 = scmp.ne.s32.totalorder %s288, %s289
      %p298 = scmp.eq.s32.totalorder %s28, 0
      %p299 = por %p297, %p298
      %p300 = scmp.ne.s32.totalorder %s288, %s289
      %p301 = scmp.eq.s32.totalorder %s29, 1
      %p302 = por %p300, %p301
      %p304 = scmp.ne.s32.totalorder %s289, %s303
      %p305 = scmp.eq.s32.totalorder %s29, 0
      %p306 = por %p304, %p305
      %s308 = sadd.s32 %s307, 1
      %p311 = scmp.eq.s32.totalorder %s23, 1
      %p312 = scmp.ne.s32.totalorder %s307, %s309
      %p313 = scmp.eq.s32.totalorder %s23, 0
      %p314 = por %p312, %p313
      %p315 = scmp.ne.s32.totalorder %s307, %s309
      %p316 = scmp.eq.s32.totalorder %s28, 1
      %p317 = por %p315, %p316
      %p318 = scmp.ne.s32.totalorder %s309, %s310
      %p319 = scmp.eq.s32.totalorder %s28, 0
      %p320 = por %p318, %p319
      %p321 = scmp.ne.s32.totalorder %s309, %s310
      %p322 = scmp.eq.s32.totalorder %s29, 1
      %p323 = por %p321, %p322
      %p325 = scmp.ne.s32.totalorder %s310, %s324
      %p326 = scmp.eq.s32.totalorder %s29, 0
      %p327 = por %p325, %p326
      %s329 = sadd.s32 %s328, 1
      %p332 = scmp.eq.s32.totalorder %s23, 1
      %p333 = scmp.ne.s32.totalorder %s328, %s330
      %p334 = scmp.eq.s32.totalorder %s23, 0
      %p335 = por %p333, %p334
      %p336 = scmp.ne.s32.totalorder %s328, %s330
      %p337 = scmp.eq.s32.totalorder %s28, 1
      %p338 = por %p336, %p337
      %p339 = scmp.ne.s32.totalorder %s330, %s331
      %p340 = scmp.eq.s32.totalorder %s28, 0
      %p341 = por %p339, %p340
      %p342 = scmp.ne.s32.totalorder %s330, %s331
      %p343 = scmp.eq.s32.totalorder %s29, 1
      %p344 = por %p342, %p343
      %p346 = scmp.ne.s32.totalorder %s331, %s345
      %p347 = scmp.eq.s32.totalorder %s29, 0
      %p348 = por %p346, %p347
      %s349 = ssub.s32 %s30, %s42
      %s350 = ssub.s32 %s31, %s38
      %s351 = sor.u32 %s349, %s350
      %p352 = scmp.eq.s32.totalorder %s351, 0
      %s354 = sadd.s32 %s353, 1
      %s355 = scalar_select %p352, %s353, %s354
      %p358 = pneg %p352
      %p359 = scmp.eq.s32.totalorder %s23, 1
      %p360 = por %p358, %p359
      %p361 = scmp.ne.s32.totalorder %s353, %s356
      %p362 = scmp.eq.s32.totalorder %s23, 0
      %p363 = por %p361, %p362
      %p364 = scmp.ne.s32.totalorder %s353, %s356
      %p365 = scmp.eq.s32.totalorder %s28, 1
      %p366 = por %p364, %p365
      %p367 = scmp.ne.s32.totalorder %s356, %s357
      %p368 = scmp.eq.s32.totalorder %s28, 0
      %p369 = por %p367, %p368
      %p370 = scmp.ne.s32.totalorder %s356, %s357
      %p371 = scmp.eq.s32.totalorder %s29, 1
      %p372 = por %p370, %p371
      %p374 = scmp.ne.s32.totalorder %s357, %s373
      %p375 = scmp.eq.s32.totalorder %s29, 0
      %p376 = por %p374, %p375
      %p377 = scmp.le.s32.totalorder 1, %s23
      %p378 = scmp.lt.s32.totalorder %s23, 3
      %p379 = pnand %p377, %p378
      %p380 = pneg %p379
      // Predicated region
      $region9: #{tpu_custom_call.1} parent=5 // pred_check
        _
      $region10: #{tpu_custom_call.1} parent=5 // pred_check_branch
        %382 = sbr.rel (%p379) target = $region12
      $region11: #{tpu_custom_call.1} parent=5 // pred_region
        %s383 = ssub.s32 %s23, 1
        // Predicated region
        $region13: #{tpu_custom_call.1} parent=11 // pred_check
          %p384 = pneg %p110
        $region14: #{tpu_custom_call.1} parent=11 // pred_check_branch
          %386 = sbr.rel (%p384) target = $region16
        $region15: #{tpu_custom_call.1} parent=11 // pred_region
          _
        $region16: #{tpu_custom_call.1} parent=11 // pred_fallthru
          _
        // Predicated region
        $region17: #{tpu_custom_call.1} parent=11 // pred_check
          %p387 = pneg %p131
        $region18: #{tpu_custom_call.1} parent=11 // pred_check_branch
          %389 = sbr.rel (%p387) target = $region20
        $region19: #{tpu_custom_call.1} parent=11 // pred_region
          _
        $region20: #{tpu_custom_call.1} parent=11 // pred_fallthru
          _
        // Predicated region
        $region21: #{tpu_custom_call.1} parent=11 // pred_check
          %p390 = pneg %p152
        $region22: #{tpu_custom_call.1} parent=11 // pred_check_branch
          %392 = sbr.rel (%p390) target = $region24
        $region23: #{tpu_custom_call.1} parent=11 // pred_region
          _
        $region24: #{tpu_custom_call.1} parent=11 // pred_fallthru
          _
        // Predicated region
        $region25: #{tpu_custom_call.1} parent=11 // pred_check
          %p393 = pneg %p173
        $region26: #{tpu_custom_call.1} parent=11 // pred_check_branch
          %395 = sbr.rel (%p393) target = $region28
        $region27: #{tpu_custom_call.1} parent=11 // pred_region
          _
        $region28: #{tpu_custom_call.1} parent=11 // pred_fallthru
          _
        // Predicated region
        $region29: #{tpu_custom_call.1} parent=11 // pred_check
          %p396 = pneg %p194
        $region30: #{tpu_custom_call.1} parent=11 // pred_check_branch
          %398 = sbr.rel (%p396) target = $region32
        $region31: #{tpu_custom_call.1} parent=11 // pred_region
          _
        $region32: #{tpu_custom_call.1} parent=11 // pred_fallthru
          _
        // Predicated region
        $region33: #{tpu_custom_call.1} parent=11 // pred_check
          %p399 = pneg %p215
        $region34: #{tpu_custom_call.1} parent=11 // pred_check_branch
          %401 = sbr.rel (%p399) target = $region36
        $region35: #{tpu_custom_call.1} parent=11 // pred_region
          _
        $region36: #{tpu_custom_call.1} parent=11 // pred_fallthru
          _
        // Predicated region
        $region37: #{tpu_custom_call.1} parent=11 // pred_check
          %p402 = pneg %p236
        $region38: #{tpu_custom_call.1} parent=11 // pred_check_branch
          %404 = sbr.rel (%p402) target = $region40
        $region39: #{tpu_custom_call.1} parent=11 // pred_region
          _
        $region40: #{tpu_custom_call.1} parent=11 // pred_fallthru
          _
        // Predicated region
        $region41: #{tpu_custom_call.1} parent=11 // pred_check
          %p405 = pneg %p257
        $region42: #{tpu_custom_call.1} parent=11 // pred_check_branch
          %407 = sbr.rel (%p405) target = $region44
        $region43: #{tpu_custom_call.1} parent=11 // pred_region
          _
        $region44: #{tpu_custom_call.1} parent=11 // pred_fallthru
          _
        // Predicated region
        $region45: #{tpu_custom_call.1} parent=11 // pred_check
          %p408 = pneg %p278
        $region46: #{tpu_custom_call.1} parent=11 // pred_check_branch
          %410 = sbr.rel (%p408) target = $region48
        $region47: #{tpu_custom_call.1} parent=11 // pred_region
          _
        $region48: #{tpu_custom_call.1} parent=11 // pred_fallthru
          _
        // Predicated region
        $region49: #{tpu_custom_call.1} parent=11 // pred_check
          %p411 = pneg %p299
        $region50: #{tpu_custom_call.1} parent=11 // pred_check_branch
          %413 = sbr.rel (%p411) target = $region52
        $region51: #{tpu_custom_call.1} parent=11 // pred_region
          _
        $region52: #{tpu_custom_call.1} parent=11 // pred_fallthru
          _
        // Predicated region
        $region53: #{tpu_custom_call.1} parent=11 // pred_check
          %p414 = pneg %p320
        $region54: #{tpu_custom_call.1} parent=11 // pred_check_branch
          %416 = sbr.rel (%p414) target = $region56
        $region55: #{tpu_custom_call.1} parent=11 // pred_region
          _
        $region56: #{tpu_custom_call.1} parent=11 // pred_fallthru
          _
        // Predicated region
        $region57: #{tpu_custom_call.1} parent=11 // pred_check
          %p417 = pneg %p341
        $region58: #{tpu_custom_call.1} parent=11 // pred_check_branch
          %419 = sbr.rel (%p417) target = $region60
        $region59: #{tpu_custom_call.1} parent=11 // pred_region
          _
        $region60: #{tpu_custom_call.1} parent=11 // pred_fallthru
          _
      $region12: #{tpu_custom_call.1} parent=5 // pred_fallthru
        _
      %p420 = scmp.lt.s32.totalorder %s23, 2
      // Predicated region
      $region61: #{tpu_custom_call.1} parent=5 // pred_check
        %p421 = pneg %p420
      $region62: #{tpu_custom_call.1} parent=5 // pred_check_branch
        %423 = sbr.rel (%p421) target = $region64
      $region63: #{tpu_custom_call.1} parent=5 // pred_region
        // Predicated region
        $region65: #{tpu_custom_call.1} parent=63 // pred_check
          %p424 = pneg %p55
        $region66: #{tpu_custom_call.1} parent=63 // pred_check_branch
          %426 = sbr.rel (%p424) target = $region68
        $region67: #{tpu_custom_call.1} parent=63 // pred_region
          %p427 = scmp.lt.s32.totalorder %s30, 1
          %s428 = scalar_select %p427, %s30, 1
          %s429 = smul.addr %s428, 8
          %s430 = scalar_lea.vmem %s0, %s429
        $region68: #{tpu_custom_call.1} parent=63 // pred_fallthru
          _
        // Predicated region
        $region69: #{tpu_custom_call.1} parent=63 // pred_check
          %p431 = pneg %p83
        $region70: #{tpu_custom_call.1} parent=63 // pred_check_branch
          %433 = sbr.rel (%p431) target = $region72
        $region71: #{tpu_custom_call.1} parent=63 // pred_region
          %p434 = scmp.lt.s32.totalorder %s30, 1
          %s435 = scalar_select %p434, %s30, 1
          %p436 = scmp.lt.s32.totalorder %s31, 0
          %s437 = scalar_select %p436, %s31, 0
          %s438 = sadd.s32 %s437, %s435
          %s439 = smul.addr %s438, 8
          %s440 = scalar_lea.vmem %s1, %s439
        $region72: #{tpu_custom_call.1} parent=63 // pred_fallthru
          _
      $region64: #{tpu_custom_call.1} parent=5 // pred_fallthru
        _
      %p441 = scmp.le.s32.totalorder 1, %s23
      %p442 = scmp.lt.s32.totalorder %s23, 3
      %p443 = pnand %p441, %p442
      %p444 = pneg %p443
      // Predicated region
      $region73: #{tpu_custom_call.1} parent=5 // pred_check
        _
      $region74: #{tpu_custom_call.1} parent=5 // pred_check_branch
        %446 = sbr.rel (%p443) target = $region76
      $region75: #{tpu_custom_call.1} parent=5 // pred_region
        %s447 = ssub.s32 %s23, 1
        %p448 = scmp.lt.s32.totalorder %s32, 1
        %s449 = scalar_select %p448, %s32, 1
        %s450 = smul.addr %s449, 8
        %s451 = scalar_lea.vmem %s0, %s450
        %p452 = pneg %p61
        %p453 = pneg %p58
        %p454 = scmp.lt.s32.totalorder %s32, 1
        %s455 = scalar_select %p454, %s32, 1
        %p456 = scmp.lt.s32.totalorder %s33, 0
        %s457 = scalar_select %p456, %s33, 0
        %s458 = sadd.s32 %s457, %s455
        %s459 = smul.addr %s458, 8
        %s460 = scalar_lea.vmem %s1, %s459
        %p461 = pneg %p89
        %p462 = pneg %p86
        %p463 = pneg %p110
        %p464 = pneg %p107
        %p465 = pneg %p131
        %p466 = pneg %p128
        %p467 = pneg %p152
        %p468 = pneg %p149
        %p469 = pneg %p173
        %p470 = pneg %p170
        %p471 = pneg %p194
        %p472 = pneg %p191
        %p473 = pneg %p215
        %p474 = pneg %p212
        %p475 = pneg %p236
        %p476 = pneg %p233
        %p477 = pneg %p257
        %p478 = pneg %p254
        %p479 = pneg %p278
        %p480 = pneg %p275
        %p481 = pneg %p299
        %p482 = pneg %p296
        %p483 = pneg %p320
        %p484 = pneg %p317
        %p485 = pneg %p341
        %p486 = pneg %p338
        %p487 = pneg %p369
        %p488 = pneg %p366
        %s489 = sand.u32 %s356, 1
        %s490 = scalar_lea.sflag [#allocation9], %s489
        %s491 = sand.u32 %s356, 1
        %s492 = smul.addr %s491, 8
        %s493 = scalar_lea.vmem [#allocation8], %s492
        %p494 = scmp.lt.s32.totalorder %s32, 1
        %s495 = scalar_select %p494, %s32, 1
        %s496 = smul.addr %s495, 8
        %s497 = scalar_lea.vmem %s0, %s496
        %p498 = scmp.lt.s32.totalorder %s32, 1
        %s499 = scalar_select %p498, %s32, 1
        %p500 = scmp.lt.s32.totalorder %s33, 0
        %s501 = scalar_select %p500, %s33, 0
        %s502 = sadd.s32 %s501, %s499
        %s503 = smul.addr %s502, 8
        %s504 = scalar_lea.vmem %s1, %s503
        %s506 = smul.u32 %s33, 8
        %p507 = scmp.eq.s32.totalorder %s33, 0
        // Predicated region
        $region77: #{tpu_custom_call.1} parent=75 // pred_check
          %p508 = pneg %p507
        $region78: #{tpu_custom_call.1} parent=75 // pred_check_branch
          %510 = sbr.rel (%p508) target = $region80
        $region79: #{tpu_custom_call.1} parent=75 // pred_region
          %v511 = vld [vmem:[%s497] sm:$0xff]
          %v512 = vpack.c.bf16 %v511, %v511
          %v513 = vld [vmem:[%s3] sm:$0xf]
          %v514 = vld [vmem:[%s3 + $0x4] sm:$0xf]
          %v515 = vld [vmem:[%s3 + $0x8] sm:$0xf]
          %v516 = vld [vmem:[%s3 + $0xc] sm:$0xf]
          %v521 = vunpack.c.l.b16 %v513
          %v522 = vunpack.c.l.b16 %v514
          %v523 = vunpack.c.l.b16 %v515
          %v524 = vunpack.c.l.b16 %v516
          %v525 = vpack.c.b16 %v522, %v521
          %v526 = vpack.c.b16 %v524, %v523
          %vm529 = vcmask 261120
          %v531 = vsel %vm529, %v512, 0
          %533 = vmatpush.bf16.msra.mxu0 0
          %534 = vmatpush.bf16.msra.mxu0 0
          %535 = vmatpush.bf16.msra.mxu0 0
          %536 = vmatpush.bf16.msra.mxu0 0
          %537 = vmatpush.bf16.msra.mxu0 0
          %538 = vmatpush.bf16.msra.mxu0 0
          %539 = vmatpush.bf16.msra.mxu0 %v526
          %540 = vmatpush.bf16.msra.mxu0 %v525
          %541 = vmatmul.bf16.gmra.mxu0 %v531
          %v542 = vpop.f32.mrf.mxu0
          %v543 = vadd.f32 0.0, %v542
          %v544 = vpop.f32.mrf.mxu0
          %545 = vdwg.mxu0
          %v546 = vpack.c.bf16 %v543, %v543
          %vm547 = vcmask 60416
          %548 = vst.msk [vmem:[#allocation3] sm:$0xf] %vm547, %v546
          %v549 = vld [vmem:[%s4] sm:$0xf]
          %v550 = vld [vmem:[%s4 + $0x4] sm:$0xf]
          %v551 = vld [vmem:[%s4 + $0x8] sm:$0xf]
          %v552 = vld [vmem:[%s4 + $0xc] sm:$0xf]
          %v557 = vunpack.c.l.b16 %v549
          %v558 = vunpack.c.l.b16 %v550
          %v559 = vunpack.c.l.b16 %v551
          %v560 = vunpack.c.l.b16 %v552
          %v561 = vpack.c.b16 %v558, %v557
          %v562 = vpack.c.b16 %v560, %v559
          %565 = vmatpush.bf16.msra.mxu0 0
          %566 = vmatpush.bf16.msra.mxu0 0
          %567 = vmatpush.bf16.msra.mxu0 0
          %568 = vmatpush.bf16.msra.mxu0 0
          %569 = vmatpush.bf16.msra.mxu0 0
          %570 = vmatpush.bf16.msra.mxu0 0
          %571 = vmatpush.bf16.msra.mxu0 %v562
          %572 = vmatpush.bf16.msra.mxu0 %v561
          %573 = vmatmul.bf16.gmra.mxu0 %v531
          %v574 = vpop.f32.mrf.mxu0
          %v575 = vadd.f32 0.0, %v574
          %v576 = vpop.f32.mrf.mxu0
          %577 = vdwg.mxu0
          %v578 = vpack.c.bf16 %v575, %v575
          %579 = vst.msk [vmem:[#allocation4] sm:$0xf] %vm547, %v578
          %s580 = scalar_lea.vmem %s3, 16
          %v581 = vld [vmem:[%s580] sm:$0xf]
          %v582 = vld [vmem:[%s580 + $0x4] sm:$0xf]
          %v583 = vld [vmem:[%s580 + $0x8] sm:$0xf]
          %v584 = vld [vmem:[%s580 + $0xc] sm:$0xf]
          %v589 = vunpack.c.l.b16 %v581
          %v590 = vunpack.c.l.b16 %v582
          %v591 = vunpack.c.l.b16 %v583
          %v592 = vunpack.c.l.b16 %v584
          %v593 = vpack.c.b16 %v590, %v589
          %v594 = vpack.c.b16 %v592, %v591
          %597 = vmatpush.bf16.msra.mxu0 0
          %598 = vmatpush.bf16.msra.mxu0 0
          %599 = vmatpush.bf16.msra.mxu0 0
          %600 = vmatpush.bf16.msra.mxu0 0
          %601 = vmatpush.bf16.msra.mxu0 0
          %602 = vmatpush.bf16.msra.mxu0 0
          %603 = vmatpush.bf16.msra.mxu0 %v594
          %604 = vmatpush.bf16.msra.mxu0 %v593
          %605 = vmatmul.bf16.gmra.mxu0 %v531
          %v606 = vpop.f32.mrf.mxu0
          %v607 = vadd.f32 0.0, %v606
          %v608 = vpop.f32.mrf.mxu0
          %609 = vdwg.mxu0
          %v610 = vpack.c.bf16 %v607, %v607
          %s611 = scalar_lea.vmem [#allocation3], 4
          %612 = vst.msk [vmem:[%s611] sm:$0xf] %vm547, %v610
          %s613 = scalar_lea.vmem %s4, 16
          %v614 = vld [vmem:[%s613] sm:$0xf]
          %v615 = vld [vmem:[%s613 + $0x4] sm:$0xf]
          %v616 = vld [vmem:[%s613 + $0x8] sm:$0xf]
          %v617 = vld [vmem:[%s613 + $0xc] sm:$0xf]
          %v622 = vunpack.c.l.b16 %v614
          %v623 = vunpack.c.l.b16 %v615
          %v624 = vunpack.c.l.b16 %v616
          %v625 = vunpack.c.l.b16 %v617
          %v626 = vpack.c.b16 %v623, %v622
          %v627 = vpack.c.b16 %v625, %v624
          %630 = vmatpush.bf16.msra.mxu0 0
          %631 = vmatpush.bf16.msra.mxu0 0
          %632 = vmatpush.bf16.msra.mxu0 0
          %633 = vmatpush.bf16.msra.mxu0 0
          %634 = vmatpush.bf16.msra.mxu0 0
          %635 = vmatpush.bf16.msra.mxu0 0
          %636 = vmatpush.bf16.msra.mxu0 %v627
          %637 = vmatpush.bf16.msra.mxu0 %v626
          %638 = vmatmul.bf16.gmra.mxu0 %v531
          %v639 = vpop.f32.mrf.mxu0
          %v640 = vadd.f32 0.0, %v639
          %v641 = vpop.f32.mrf.mxu0
          %642 = vdwg.mxu0
          %v643 = vpack.c.bf16 %v640, %v640
          %s644 = scalar_lea.vmem [#allocation4], 4
          %645 = vst.msk [vmem:[%s644] sm:$0xf] %vm547, %v643
          %s646 = scalar_lea.vmem %s3, 32
          %v647 = vld [vmem:[%s646] sm:$0xf]
          %v648 = vld [vmem:[%s646 + $0x4] sm:$0xf]
          %v649 = vld [vmem:[%s646 + $0x8] sm:$0xf]
          %v650 = vld [vmem:[%s646 + $0xc] sm:$0xf]
          %v655 = vunpack.c.l.b16 %v647
          %v656 = vunpack.c.l.b16 %v648
          %v657 = vunpack.c.l.b16 %v649
          %v658 = vunpack.c.l.b16 %v650
          %v659 = vpack.c.b16 %v656, %v655
          %v660 = vpack.c.b16 %v658, %v657
          %663 = vmatpush.bf16.msra.mxu0 0
          %664 = vmatpush.bf16.msra.mxu0 0
          %665 = vmatpush.bf16.msra.mxu0 0
          %666 = vmatpush.bf16.msra.mxu0 0
          %667 = vmatpush.bf16.msra.mxu0 0
          %668 = vmatpush.bf16.msra.mxu0 0
          %669 = vmatpush.bf16.msra.mxu0 %v660
          %670 = vmatpush.bf16.msra.mxu0 %v659
          %671 = vmatmul.bf16.gmra.mxu0 %v531
          %v672 = vpop.f32.mrf.mxu0
          %v673 = vadd.f32 0.0, %v672
          %v674 = vpop.f32.mrf.mxu0
          %675 = vdwg.mxu0
          %v676 = vpack.c.bf16 %v673, %v673
          %s677 = scalar_lea.vmem [#allocation3], 8
          %678 = vst.msk [vmem:[%s677] sm:$0xf] %vm547, %v676
          %s679 = scalar_lea.vmem %s4, 32
          %v680 = vld [vmem:[%s679] sm:$0xf]
          %v681 = vld [vmem:[%s679 + $0x4] sm:$0xf]
          %v682 = vld [vmem:[%s679 + $0x8] sm:$0xf]
          %v683 = vld [vmem:[%s679 + $0xc] sm:$0xf]
          %v688 = vunpack.c.l.b16 %v680
          %v689 = vunpack.c.l.b16 %v681
          %v690 = vunpack.c.l.b16 %v682
          %v691 = vunpack.c.l.b16 %v683
          %v692 = vpack.c.b16 %v689, %v688
          %v693 = vpack.c.b16 %v691, %v690
          %696 = vmatpush.bf16.msra.mxu0 0
          %697 = vmatpush.bf16.msra.mxu0 0
          %698 = vmatpush.bf16.msra.mxu0 0
          %699 = vmatpush.bf16.msra.mxu0 0
          %700 = vmatpush.bf16.msra.mxu0 0
          %701 = vmatpush.bf16.msra.mxu0 0
          %702 = vmatpush.bf16.msra.mxu0 %v693
          %703 = vmatpush.bf16.msra.mxu0 %v692
          %704 = vmatmul.bf16.gmra.mxu0 %v531
          %v705 = vpop.f32.mrf.mxu0
          %v706 = vadd.f32 0.0, %v705
          %v707 = vpop.f32.mrf.mxu0
          %708 = vdwg.mxu0
          %v709 = vpack.c.bf16 %v706, %v706
          %s710 = scalar_lea.vmem [#allocation4], 8
          %711 = vst.msk [vmem:[%s710] sm:$0xf] %vm547, %v709
          %s712 = scalar_lea.vmem %s3, 48
          %v713 = vld [vmem:[%s712] sm:$0xf]
          %v714 = vld [vmem:[%s712 + $0x4] sm:$0xf]
          %v715 = vld [vmem:[%s712 + $0x8] sm:$0xf]
          %v716 = vld [vmem:[%s712 + $0xc] sm:$0xf]
          %v721 = vunpack.c.l.b16 %v713
          %v722 = vunpack.c.l.b16 %v714
          %v723 = vunpack.c.l.b16 %v715
          %v724 = vunpack.c.l.b16 %v716
          %v725 = vpack.c.b16 %v722, %v721
          %v726 = vpack.c.b16 %v724, %v723
          %729 = vmatpush.bf16.msra.mxu0 0
          %730 = vmatpush.bf16.msra.mxu0 0
          %731 = vmatpush.bf16.msra.mxu0 0
          %732 = vmatpush.bf16.msra.mxu0 0
          %733 = vmatpush.bf16.msra.mxu0 0
          %734 = vmatpush.bf16.msra.mxu0 0
          %735 = vmatpush.bf16.msra.mxu0 %v726
          %736 = vmatpush.bf16.msra.mxu0 %v725
          %737 = vmatmul.bf16.gmra.mxu0 %v531
          %v738 = vpop.f32.mrf.mxu0
          %v739 = vadd.f32 0.0, %v738
          %v740 = vpop.f32.mrf.mxu0
          %741 = vdwg.mxu0
          %v742 = vpack.c.bf16 %v739, %v739
          %s743 = scalar_lea.vmem [#allocation3], 12
          %744 = vst.msk [vmem:[%s743] sm:$0xf] %vm547, %v742
          %s745 = scalar_lea.vmem %s4, 48
          %v746 = vld [vmem:[%s745] sm:$0xf]
          %v747 = vld [vmem:[%s745 + $0x4] sm:$0xf]
          %v748 = vld [vmem:[%s745 + $0x8] sm:$0xf]
          %v749 = vld [vmem:[%s745 + $0xc] sm:$0xf]
          %v754 = vunpack.c.l.b16 %v746
          %v755 = vunpack.c.l.b16 %v747
          %v756 = vunpack.c.l.b16 %v748
          %v757 = vunpack.c.l.b16 %v749
          %v758 = vpack.c.b16 %v755, %v754
          %v759 = vpack.c.b16 %v757, %v756
          %762 = vmatpush.bf16.msra.mxu0 0
          %763 = vmatpush.bf16.msra.mxu0 0
          %764 = vmatpush.bf16.msra.mxu0 0
          %765 = vmatpush.bf16.msra.mxu0 0
          %766 = vmatpush.bf16.msra.mxu0 0
          %767 = vmatpush.bf16.msra.mxu0 0
          %768 = vmatpush.bf16.msra.mxu0 %v759
          %769 = vmatpush.bf16.msra.mxu0 %v758
          %770 = vmatmul.bf16.gmra.mxu0 %v531
          %v771 = vpop.f32.mrf.mxu0
          %v772 = vadd.f32 0.0, %v771
          %v773 = vpop.f32.mrf.mxu0
          %774 = vdwg.mxu0
          %v775 = vpack.c.bf16 %v772, %v772
          %s776 = scalar_lea.vmem [#allocation4], 12
          %777 = vst.msk [vmem:[%s776] sm:$0xf] %vm547, %v775
        $region80: #{tpu_custom_call.1} parent=75 // pred_fallthru
          _
        %v778 = vld [vmem:[%s504] sm:$0xff]
        %v779 = vpack.c.bf16 %v778, %v778
        %v780 = vld [vmem:[%s2] sm:$0xf]
        %v781 = vld [vmem:[%s2 + $0x4] sm:$0xf]
        %v782 = vld [vmem:[%s2 + $0x8] sm:$0xf]
        %v783 = vld [vmem:[%s2 + $0xc] sm:$0xf]
        %v788 = vunpack.c.l.b16 %v780
        %v789 = vunpack.c.l.b16 %v781
        %v790 = vunpack.c.l.b16 %v782
        %v791 = vunpack.c.l.b16 %v783
        %v792 = vpack.c.b16 %v789, %v788
        %v793 = vpack.c.b16 %v791, %v790
        %vm796 = vcmask 261120
        %v798 = vsel %vm796, %v779, 0
        %800 = vmatpush.bf16.msra.mxu0 0
        %801 = vmatpush.bf16.msra.mxu0 0
        %802 = vmatpush.bf16.msra.mxu0 0
        %803 = vmatpush.bf16.msra.mxu0 0
        %804 = vmatpush.bf16.msra.mxu0 0
        %805 = vmatpush.bf16.msra.mxu0 0
        %806 = vmatpush.bf16.msra.mxu0 %v793
        %807 = vmatpush.bf16.msra.mxu0 %v792
        %808 = vmatmul.bf16.gmra.mxu0 %v798
        %v809 = vpop.f32.mrf.mxu0
        %v810 = vadd.f32 0.0, %v809
        %v811 = vpop.f32.mrf.mxu0
        %812 = vdwg.mxu0
        %v813 = vmul.f32 %v810, 0.35355338
        %v814 = vpack.c.bf16 %v813, %v813
        %vm815 = vcmask 60416
        %816 = vst.msk [vmem:[#allocation2] sm:$0xf] %vm815, %v814
        %s817 = scalar_lea.vmem %s2, 16
        %v818 = vld [vmem:[%s817] sm:$0xf]
        %v819 = vld [vmem:[%s817 + $0x4] sm:$0xf]
        %v820 = vld [vmem:[%s817 + $0x8] sm:$0xf]
        %v821 = vld [vmem:[%s817 + $0xc] sm:$0xf]
        %v826 = vunpack.c.l.b16 %v818
        %v827 = vunpack.c.l.b16 %v819
        %v828 = vunpack.c.l.b16 %v820
        %v829 = vunpack.c.l.b16 %v821
        %v830 = vpack.c.b16 %v827, %v826
        %v831 = vpack.c.b16 %v829, %v828
        %834 = vmatpush.bf16.msra.mxu0 0
        %835 = vmatpush.bf16.msra.mxu0 0
        %836 = vmatpush.bf16.msra.mxu0 0
        %837 = vmatpush.bf16.msra.mxu0 0
        %838 = vmatpush.bf16.msra.mxu0 0
        %839 = vmatpush.bf16.msra.mxu0 0
        %840 = vmatpush.bf16.msra.mxu0 %v831
        %841 = vmatpush.bf16.msra.mxu0 %v830
        %842 = vmatmul.bf16.gmra.mxu0 %v798
        %v843 = vpop.f32.mrf.mxu0
        %v844 = vadd.f32 0.0, %v843
        %v845 = vpop.f32.mrf.mxu0
        %846 = vdwg.mxu0
        %v847 = vmul.f32 %v844, 0.35355338
        %v848 = vpack.c.bf16 %v847, %v847
        %s849 = scalar_lea.vmem [#allocation2], 4
        %850 = vst.msk [vmem:[%s849] sm:$0xf] %vm815, %v848
        %s851 = scalar_lea.vmem %s2, 32
        %v852 = vld [vmem:[%s851] sm:$0xf]
        %v853 = vld [vmem:[%s851 + $0x4] sm:$0xf]
        %v854 = vld [vmem:[%s851 + $0x8] sm:$0xf]
        %v855 = vld [vmem:[%s851 + $0xc] sm:$0xf]
        %v860 = vunpack.c.l.b16 %v852
        %v861 = vunpack.c.l.b16 %v853
        %v862 = vunpack.c.l.b16 %v854
        %v863 = vunpack.c.l.b16 %v855
        %v864 = vpack.c.b16 %v861, %v860
        %v865 = vpack.c.b16 %v863, %v862
        %868 = vmatpush.bf16.msra.mxu0 0
        %869 = vmatpush.bf16.msra.mxu0 0
        %870 = vmatpush.bf16.msra.mxu0 0
        %871 = vmatpush.bf16.msra.mxu0 0
        %872 = vmatpush.bf16.msra.mxu0 0
        %873 = vmatpush.bf16.msra.mxu0 0
        %874 = vmatpush.bf16.msra.mxu0 %v865
        %875 = vmatpush.bf16.msra.mxu0 %v864
        %876 = vmatmul.bf16.gmra.mxu0 %v798
        %v877 = vpop.f32.mrf.mxu0
        %v878 = vadd.f32 0.0, %v877
        %v879 = vpop.f32.mrf.mxu0
        %880 = vdwg.mxu0
        %v881 = vmul.f32 %v878, 0.35355338
        %v882 = vpack.c.bf16 %v881, %v881
        %s883 = scalar_lea.vmem [#allocation2], 8
        %884 = vst.msk [vmem:[%s883] sm:$0xf] %vm815, %v882
        %s885 = scalar_lea.vmem %s2, 48
        %v886 = vld [vmem:[%s885] sm:$0xf]
        %v887 = vld [vmem:[%s885 + $0x4] sm:$0xf]
        %v888 = vld [vmem:[%s885 + $0x8] sm:$0xf]
        %v889 = vld [vmem:[%s885 + $0xc] sm:$0xf]
        %v894 = vunpack.c.l.b16 %v886
        %v895 = vunpack.c.l.b16 %v887
        %v896 = vunpack.c.l.b16 %v888
        %v897 = vunpack.c.l.b16 %v889
        %v898 = vpack.c.b16 %v895, %v894
        %v899 = vpack.c.b16 %v897, %v896
        %902 = vmatpush.bf16.msra.mxu0 0
        %903 = vmatpush.bf16.msra.mxu0 0
        %904 = vmatpush.bf16.msra.mxu0 0
        %905 = vmatpush.bf16.msra.mxu0 0
        %906 = vmatpush.bf16.msra.mxu0 0
        %907 = vmatpush.bf16.msra.mxu0 0
        %908 = vmatpush.bf16.msra.mxu0 %v899
        %909 = vmatpush.bf16.msra.mxu0 %v898
        %910 = vmatmul.bf16.gmra.mxu0 %v798
        %v911 = vpop.f32.mrf.mxu0
        %v912 = vadd.f32 0.0, %v911
        %v913 = vpop.f32.mrf.mxu0
        %914 = vdwg.mxu0
        %v915 = vmul.f32 %v912, 0.35355338
        %v916 = vpack.c.bf16 %v915, %v915
        %s917 = scalar_lea.vmem [#allocation2], 12
        %918 = vst.msk [vmem:[%s917] sm:$0xf] %vm815, %v916
        %v919 = vld [vmem:[#allocation2] sm:$0xf]
        %v920 = vld [vmem:[#allocation2 + $0x4] sm:$0xf]
        %v921 = vld [vmem:[#allocation2 + $0x8] sm:$0xf]
        %v922 = vld [vmem:[#allocation2 + $0xc] sm:$0xf]
        %vm923 = vcmask 7168
        %924 = vst.msk [vmem:[#allocation5] sm:$0xff] %vm923, -1e+30
        %925 = vst.msk [vmem:[#allocation5 + $0x8] sm:$0xff] %vm923, -1e+30
        %926 = vst.msk [vmem:[#allocation5 + $0x10] sm:$0xff] %vm923, -1e+30
        %927 = vst.msk [vmem:[#allocation5 + $0x18] sm:$0xff] %vm923, -1e+30
        %928 = vst.msk [vmem:[#allocation6] sm:$0xff] %vm923, 0.0
        %929 = vst.msk [vmem:[#allocation6 + $0x8] sm:$0xff] %vm923, 0.0
        %930 = vst.msk [vmem:[#allocation6 + $0x10] sm:$0xff] %vm923, 0.0
        %931 = vst.msk [vmem:[#allocation6 + $0x18] sm:$0xff] %vm923, 0.0
        %vm932 = vcmask 64512
        %933 = vst.msk [vmem:[#allocation7] sm:$0xff] %vm932, 0.0
        %934 = vst.msk [vmem:[#allocation7 + $0x8] sm:$0xff] %vm932, 0.0
        %935 = vst.msk [vmem:[#allocation7 + $0x10] sm:$0xff] %vm932, 0.0
        %936 = vst.msk [vmem:[#allocation7 + $0x18] sm:$0xff] %vm932, 0.0
        %s937 = sadd.s32 %s33, 1
        // While loop
        $region81: #{tpu_custom_call.1} parent=75 // loop_pre_header
          _
        $region82: #{tpu_custom_call.1} parent=75 // loop_header
          %s939 = sphi 0, %s941
          %p940 = scmp.ge.s32.totalorder %s939, %s937
        $region83: #{tpu_custom_call.1} parent=75 // loop_header_branch
          %943 = sbr.rel (%p940) target = $region87
        $region84: #{tpu_custom_call.1} parent=75 // loop_body
          %s944 = smul.u32 %s939, 8
          %s945 = sshra.s32 %s944, 3
          %s946 = sand.u32 %s944, 7
          %s947 = smul.addr %s945, 4
          %s948 = scalar_lea.vmem [#allocation3], %s947
          %v949 = vld [vmem:[%s948] sm:$0xf]
          %v950 = vld [vmem:[%s948 + $0x4] sm:$0xf]
          %v951 = vld [vmem:[%s948 + $0x8] sm:$0xf]
          %v952 = vld [vmem:[%s948 + $0xc] sm:$0xf]
          %s953 = smul.addr %s945, 4
          %s954 = scalar_lea.vmem [#allocation4], %s953
          %v955 = vld [vmem:[%s954] sm:$0xf]
          %v956 = vld [vmem:[%s954 + $0x4] sm:$0xf]
          %v957 = vld [vmem:[%s954 + $0x8] sm:$0xf]
          %v958 = vld [vmem:[%s954 + $0xc] sm:$0xf]
          %v960 = vsel %vm932, %v919, 0
          %v963 = vsel %vm932, %v949, 0
          %965 = vmatpush.bf16.xpose.msra.mxu0 0
          %966 = vmatpush.bf16.xpose.msra.mxu0 0
          %967 = vmatpush.bf16.xpose.msra.mxu0 0
          %968 = vmatpush.bf16.xpose.msra.mxu0 0
          %969 = vmatpush.bf16.xpose.msra.mxu0 0
          %970 = vmatpush.bf16.xpose.msra.mxu0 0
          %971 = vmatpush.bf16.xpose.msra.mxu0 0
          %972 = vmatpush.bf16.xpose.msra.mxu0 %v963
          %973 = vmatmul.bf16.gmra.mxu0 %v960
          %v974 = vpop.f32.mrf.mxu0
          %v975 = vadd.f32 0.0, %v974
          %v976 = vpop.f32.mrf.mxu0
          %977 = vdwg.mxu0
          %v979 = vsel %vm932, %v920, 0
          %v982 = vsel %vm932, %v950, 0
          %984 = vmatpush.bf16.xpose.msra.mxu0 0
          %985 = vmatpush.bf16.xpose.msra.mxu0 0
          %986 = vmatpush.bf16.xpose.msra.mxu0 0
          %987 = vmatpush.bf16.xpose.msra.mxu0 0
          %988 = vmatpush.bf16.xpose.msra.mxu0 0
          %989 = vmatpush.bf16.xpose.msra.mxu0 0
          %990 = vmatpush.bf16.xpose.msra.mxu0 0
          %991 = vmatpush.bf16.xpose.msra.mxu0 %v982
          %992 = vmatmul.bf16.gmra.mxu0 %v979
          %v993 = vpop.f32.mrf.mxu0
          %v994 = vadd.f32 0.0, %v993
          %v995 = vpop.f32.mrf.mxu0
          %996 = vdwg.mxu0
          %v998 = vsel %vm932, %v921, 0
          %v1001 = vsel %vm932, %v951, 0
          %1003 = vmatpush.bf16.xpose.msra.mxu0 0
          %1004 = vmatpush.bf16.xpose.msra.mxu0 0
          %1005 = vmatpush.bf16.xpose.msra.mxu0 0
          %1006 = vmatpush.bf16.xpose.msra.mxu0 0
          %1007 = vmatpush.bf16.xpose.msra.mxu0 0
          %1008 = vmatpush.bf16.xpose.msra.mxu0 0
          %1009 = vmatpush.bf16.xpose.msra.mxu0 0
          %1010 = vmatpush.bf16.xpose.msra.mxu0 %v1001
          %1011 = vmatmul.bf16.gmra.mxu0 %v998
          %v1012 = vpop.f32.mrf.mxu0
          %v1013 = vadd.f32 0.0, %v1012
          %v1014 = vpop.f32.mrf.mxu0
          %1015 = vdwg.mxu0
          %v1017 = vsel %vm932, %v922, 0
          %v1020 = vsel %vm932, %v952, 0
          %1022 = vmatpush.bf16.xpose.msra.mxu0 0
          %1023 = vmatpush.bf16.xpose.msra.mxu0 0
          %1024 = vmatpush.bf16.xpose.msra.mxu0 0
          %1025 = vmatpush.bf16.xpose.msra.mxu0 0
          %1026 = vmatpush.bf16.xpose.msra.mxu0 0
          %1027 = vmatpush.bf16.xpose.msra.mxu0 0
          %1028 = vmatpush.bf16.xpose.msra.mxu0 0
          %1029 = vmatpush.bf16.xpose.msra.mxu0 %v1020
          %1030 = vmatmul.bf16.gmra.mxu0 %v1017
          %v1031 = vpop.f32.mrf.mxu0
          %v1032 = vadd.f32 0.0, %v1031
          %v1033 = vpop.f32.mrf.mxu0
          %1034 = vdwg.mxu0
          %v1035 = vlaneseq
          %v1036 = vshrl.u32 %v1035, 7
          %v1037 = vstv %s506
          %v1038 = vadd.s32 %v1037, %v1036
          %v1039 = vlaneseq
          %v1040 = vand.u32 %v1039, 127
          %v1041 = vstv %s944
          %v1042 = vadd.s32 %v1041, %v1040
          %vm1043 = vcmp.le.s32.totalorder %v1042, %v1038
          %v1044 = vsel %vm1043, %v975, -1e+30
          %v1045 = vsel %vm1043, %v994, -1e+30
          %v1046 = vsel %vm1043, %v1013, -1e+30
          %v1047 = vsel %vm1043, %v1032, -1e+30
          %v1048 = vld [vmem:[#allocation5] sm:$0xff]
          %v1049 = vld [vmem:[#allocation5 + $0x8] sm:$0xff]
          %v1050 = vld [vmem:[#allocation5 + $0x10] sm:$0xff]
          %v1051 = vld [vmem:[#allocation5 + $0x18] sm:$0xff]
          %v1052 = vld [vmem:[#allocation6] sm:$0xff]
          %v1053 = vld [vmem:[#allocation6 + $0x8] sm:$0xff]
          %v1054 = vld [vmem:[#allocation6 + $0x10] sm:$0xff]
          %v1055 = vld [vmem:[#allocation6 + $0x18] sm:$0xff]
          %v1056 = vld [vmem:[#allocation7] sm:$0xff]
          %v1057 = vld [vmem:[#allocation7 + $0x8] sm:$0xff]
          %v1058 = vld [vmem:[#allocation7 + $0x10] sm:$0xff]
          %v1059 = vld [vmem:[#allocation7 + $0x18] sm:$0xff]
          %v1060 = vsel %vm932, %v1044, -inf
          %1061 = vmax.xlane.f32.xlu0 %v1060
          %v1062 = vpop.xlane.xlu0 %1061
          %v1063 = vsel %vm932, %v1045, -inf
          %1064 = vmax.xlane.f32.xlu0 %v1063
          %v1065 = vpop.xlane.xlu0 %1064
          %v1066 = vsel %vm932, %v1046, -inf
          %1067 = vmax.xlane.f32.xlu0 %v1066
          %v1068 = vpop.xlane.xlu0 %1067
          %v1069 = vsel %vm932, %v1047, -inf
          %1070 = vmax.xlane.f32.xlu0 %v1069
          %v1071 = vpop.xlane.xlu0 %1070
          %v1072 = vmax.f32 %v1048, %v1062
          %v1073 = vmax.f32 %v1049, %v1065
          %v1074 = vmax.f32 %v1050, %v1068
          %v1075 = vmax.f32 %v1051, %v1071
          %v1076 = vsub.f32 %v1048, %v1072
          %v1077 = vsub.f32 %v1049, %v1073
          %v1078 = vsub.f32 %v1050, %v1074
          %v1079 = vsub.f32 %v1051, %v1075
          %v1080 = vmul.f32 %v1076, 1.442695
          %v1081 = vpow.pop %v1080
          %v1082 = vmul.f32 %v1077, 1.442695
          %v1083 = vpow.pop %v1082
          %v1084 = vmul.f32 %v1078, 1.442695
          %v1085 = vpow.pop %v1084
          %v1086 = vmul.f32 %v1079, 1.442695
          %v1087 = vpow.pop %v1086
          %1089 = vset.pattern.permute.xlu0 0
          %1090 = vperm.xlu0 %1089, %v1072
          %v1091 = vpop.permute.xlu0 %1090
          %1094 = vset.pattern.permute.xlu0 0
          %1095 = vperm.xlu0 %1094, %v1073
          %v1096 = vpop.permute.xlu0 %1095
          %1099 = vset.pattern.permute.xlu0 0
          %1100 = vperm.xlu0 %1099, %v1074
          %v1101 = vpop.permute.xlu0 %1100
          %1104 = vset.pattern.permute.xlu0 0
          %1105 = vperm.xlu0 %1104, %v1075
          %v1106 = vpop.permute.xlu0 %1105
          %v1108 = vsub.f32 %v1044, %v1091
          %v1109 = vsub.f32 %v1045, %v1096
          %v1110 = vsub.f32 %v1046, %v1101
          %v1111 = vsub.f32 %v1047, %v1106
          %v1112 = vmul.f32 %v1108, 1.442695
          %v1113 = vpow.pop %v1112
          %v1114 = vmul.f32 %v1109, 1.442695
          %v1115 = vpow.pop %v1114
          %v1116 = vmul.f32 %v1110, 1.442695
          %v1117 = vpow.pop %v1116
          %v1118 = vmul.f32 %v1111, 1.442695
          %v1119 = vpow.pop %v1118
          %v1120 = vpack.c.bf16 %v1113, %v1113
          %v1121 = vpack.c.bf16 %v1115, %v1115
          %v1122 = vpack.c.bf16 %v1117, %v1117
          %v1123 = vpack.c.bf16 %v1119, %v1119
          %v1125 = vsel %vm932, %v1120, 0
          %vm1127 = vcmask 1043456
          %v1129 = vsel %vm1127, %v955, 0
          %1131 = vmatpush.bf16.msra.mxu0 0
          %1132 = vmatpush.bf16.msra.mxu0 0
          %1133 = vmatpush.bf16.msra.mxu0 0
          %1134 = vmatpush.bf16.msra.mxu0 0
          %1135 = vmatpush.bf16.msra.mxu0 0
          %1136 = vmatpush.bf16.msra.mxu0 0
          %1137 = vmatpush.bf16.msra.mxu0 0
          %1138 = vmatpush.bf16.msra.mxu0 %v1129
          %1139 = vmatmul.bf16.gmra.mxu0 %v1125
          %v1140 = vpop.f32.mrf.mxu0
          %v1141 = vadd.f32 0.0, %v1140
          %v1142 = vpop.f32.mrf.mxu0
          %1143 = vdwg.mxu0
          %v1145 = vsel %vm932, %v1121, 0
          %v1148 = vsel %vm1127, %v956, 0
          %1150 = vmatpush.bf16.msra.mxu0 0
          %1151 = vmatpush.bf16.msra.mxu0 0
          %1152 = vmatpush.bf16.msra.mxu0 0
          %1153 = vmatpush.bf16.msra.mxu0 0
          %1154 = vmatpush.bf16.msra.mxu0 0
          %1155 = vmatpush.bf16.msra.mxu0 0
          %1156 = vmatpush.bf16.msra.mxu0 0
          %1157 = vmatpush.bf16.msra.mxu0 %v1148
          %1158 = vmatmul.bf16.gmra.mxu0 %v1145
          %v1159 = vpop.f32.mrf.mxu0
          %v1160 = vadd.f32 0.0, %v1159
          %v1161 = vpop.f32.mrf.mxu0
          %1162 = vdwg.mxu0
          %v1164 = vsel %vm932, %v1122, 0
          %v1167 = vsel %vm1127, %v957, 0
          %1169 = vmatpush.bf16.msra.mxu0 0
          %1170 = vmatpush.bf16.msra.mxu0 0
          %1171 = vmatpush.bf16.msra.mxu0 0
          %1172 = vmatpush.bf16.msra.mxu0 0
          %1173 = vmatpush.bf16.msra.mxu0 0
          %1174 = vmatpush.bf16.msra.mxu0 0
          %1175 = vmatpush.bf16.msra.mxu0 0
          %1176 = vmatpush.bf16.msra.mxu0 %v1167
          %1177 = vmatmul.bf16.gmra.mxu0 %v1164
          %v1178 = vpop.f32.mrf.mxu0
          %v1179 = vadd.f32 0.0, %v1178
          %v1180 = vpop.f32.mrf.mxu0
          %1181 = vdwg.mxu0
          %v1183 = vsel %vm932, %v1123, 0
          %v1186 = vsel %vm1127, %v958, 0
          %1188 = vmatpush.bf16.msra.mxu0 0
          %1189 = vmatpush.bf16.msra.mxu0 0
          %1190 = vmatpush.bf16.msra.mxu0 0
          %1191 = vmatpush.bf16.msra.mxu0 0
          %1192 = vmatpush.bf16.msra.mxu0 0
          %1193 = vmatpush.bf16.msra.mxu0 0
          %1194 = vmatpush.bf16.msra.mxu0 0
          %1195 = vmatpush.bf16.msra.mxu0 %v1186
          %1196 = vmatmul.bf16.gmra.mxu0 %v1183
          %v1197 = vpop.f32.mrf.mxu0
          %v1198 = vadd.f32 0.0, %v1197
          %v1199 = vpop.f32.mrf.mxu0
          %1200 = vdwg.mxu0
          %v1201 = vmul.f32 %v1081, %v1052
          %v1202 = vmul.f32 %v1083, %v1053
          %v1203 = vmul.f32 %v1085, %v1054
          %v1204 = vmul.f32 %v1087, %v1055
          %v1205 = vsel %vm932, %v1113, 0.0
          %1206 = vadd.xlane.f32.xlu0 %v1205
          %v1207 = vpop.xlane.xlu0 %1206
          %v1208 = vsel %vm932, %v1115, 0.0
          %1209 = vadd.xlane.f32.xlu0 %v1208
          %v1210 = vpop.xlane.xlu0 %1209
          %v1211 = vsel %vm932, %v1117, 0.0
          %1212 = vadd.xlane.f32.xlu0 %v1211
          %v1213 = vpop.xlane.xlu0 %1212
          %v1214 = vsel %vm932, %v1119, 0.0
          %1215 = vadd.xlane.f32.xlu0 %v1214
          %v1216 = vpop.xlane.xlu0 %1215
          %v1217 = vadd.f32 %v1201, %v1207
          %v1218 = vadd.f32 %v1202, %v1210
          %v1219 = vadd.f32 %v1203, %v1213
          %v1220 = vadd.f32 %v1204, %v1216
          %1221 = vst.msk [vmem:[#allocation6] sm:$0xff] %vm923, %v1217
          %1222 = vst.msk [vmem:[#allocation6 + $0x8] sm:$0xff] %vm923, %v1218
          %1223 = vst.msk [vmem:[#allocation6 + $0x10] sm:$0xff] %vm923, %v1219
          %1224 = vst.msk [vmem:[#allocation6 + $0x18] sm:$0xff] %vm923, %v1220
          %1226 = vset.pattern.permute.xlu0 0
          %1227 = vperm.xlu0 %1226, %v1081
          %v1228 = vpop.permute.xlu0 %1227
          %1231 = vset.pattern.permute.xlu0 0
          %1232 = vperm.xlu0 %1231, %v1083
          %v1233 = vpop.permute.xlu0 %1232
          %1236 = vset.pattern.permute.xlu0 0
          %1237 = vperm.xlu0 %1236, %v1085
          %v1238 = vpop.permute.xlu0 %1237
          %1241 = vset.pattern.permute.xlu0 0
          %1242 = vperm.xlu0 %1241, %v1087
          %v1243 = vpop.permute.xlu0 %1242
          %v1245 = vmul.f32 %v1228, %v1056
          %v1246 = vmul.f32 %v1233, %v1057
          %v1247 = vmul.f32 %v1238, %v1058
          %v1248 = vmul.f32 %v1243, %v1059
          %v1249 = vadd.f32 %v1245, %v1141
          %v1250 = vadd.f32 %v1246, %v1160
          %v1251 = vadd.f32 %v1247, %v1179
          %v1252 = vadd.f32 %v1248, %v1198
          %1253 = vst.msk [vmem:[#allocation7] sm:$0xff] %vm932, %v1249
          %1254 = vst.msk [vmem:[#allocation7 + $0x8] sm:$0xff] %vm932, %v1250
          %1255 = vst.msk [vmem:[#allocation7 + $0x10] sm:$0xff] %vm932, %v1251
          %1256 = vst.msk [vmem:[#allocation7 + $0x18] sm:$0xff] %vm932, %v1252
          %1257 = vst.msk [vmem:[#allocation5] sm:$0xff] %vm923, %v1072
          %1258 = vst.msk [vmem:[#allocation5 + $0x8] sm:$0xff] %vm923, %v1073
          %1259 = vst.msk [vmem:[#allocation5 + $0x10] sm:$0xff] %vm923, %v1074
          %1260 = vst.msk [vmem:[#allocation5 + $0x18] sm:$0xff] %vm923, %v1075
        $region85: #{tpu_custom_call.1} parent=75 // loop_footer
          %s941 = sadd.s32 %s939, 1
        $region86: #{tpu_custom_call.1} parent=75 // loop_footer_branch
          %938 = sbr.rel target = $region82
        $region87: #{tpu_custom_call.1} parent=75 // loop_exit
          _
        %v1261 = vld [vmem:[#allocation6] sm:$0xff]
        %v1262 = vld [vmem:[#allocation6 + $0x8] sm:$0xff]
        %v1263 = vld [vmem:[#allocation6 + $0x10] sm:$0xff]
        %v1264 = vld [vmem:[#allocation6 + $0x18] sm:$0xff]
        %v1265 = vrcp.pop %v1261
        %v1266 = vrcp.pop %v1262
        %v1267 = vrcp.pop %v1263
        %v1268 = vrcp.pop %v1264
        %v1269 = vld [vmem:[#allocation7] sm:$0xff]
        %v1270 = vld [vmem:[#allocation7 + $0x8] sm:$0xff]
        %v1271 = vld [vmem:[#allocation7 + $0x10] sm:$0xff]
        %v1272 = vld [vmem:[#allocation7 + $0x18] sm:$0xff]
        %1274 = vset.pattern.permute.xlu0 0
        %1275 = vperm.xlu0 %1274, %v1265
        %v1276 = vpop.permute.xlu0 %1275
        %1279 = vset.pattern.permute.xlu0 0
        %1280 = vperm.xlu0 %1279, %v1266
        %v1281 = vpop.permute.xlu0 %1280
        %1284 = vset.pattern.permute.xlu0 0
        %1285 = vperm.xlu0 %1284, %v1267
        %v1286 = vpop.permute.xlu0 %1285
        %1289 = vset.pattern.permute.xlu0 0
        %1290 = vperm.xlu0 %1289, %v1268
        %v1291 = vpop.permute.xlu0 %1290
        %v1293 = vmul.f32 %v1269, %v1276
        %v1294 = vmul.f32 %v1270, %v1281
        %v1295 = vmul.f32 %v1271, %v1286
        %v1296 = vmul.f32 %v1272, %v1291
        %v1297 = vpack.c.bf16 %v1293, %v1293
        %v1298 = vpack.c.bf16 %v1294, %v1294
        %v1299 = vpack.c.bf16 %v1295, %v1295
        %v1300 = vpack.c.bf16 %v1296, %v1296
        %v1301 = vld [vmem:[%s5] sm:$0xf]
        %s1302 = scalar_lea.vmem %s5, 4
        %v1303 = vld [vmem:[%s1302] sm:$0xf]
        %v1305 = vsel %vm932, %v1298, 0
        %vm1307 = vcmask 1043456
        %v1309 = vsel %vm1307, %v1303, 0
        %1311 = vmatpush.bf16.msra.mxu0 0
        %1312 = vmatpush.bf16.msra.mxu0 0
        %1313 = vmatpush.bf16.msra.mxu0 0
        %1314 = vmatpush.bf16.msra.mxu0 0
        %1315 = vmatpush.bf16.msra.mxu0 0
        %1316 = vmatpush.bf16.msra.mxu0 0
        %1317 = vmatpush.bf16.msra.mxu0 0
        %1318 = vmatpush.bf16.msra.mxu0 %v1309
        %1319 = vmatmul.bf16.gmra.mxu0 %v1305
        %v1320 = vpop.f32.mrf.mxu0
        %v1321 = vadd.f32 0.0, %v1320
        %v1322 = vpop.f32.mrf.mxu0
        %1323 = vdwg.mxu0
        %v1325 = vsel %vm932, %v1297, 0
        %v1328 = vsel %vm1307, %v1301, 0
        %1330 = vmatpush.bf16.msra.mxu0 0
        %1331 = vmatpush.bf16.msra.mxu0 0
        %1332 = vmatpush.bf16.msra.mxu0 0
        %1333 = vmatpush.bf16.msra.mxu0 0
        %1334 = vmatpush.bf16.msra.mxu0 0
        %1335 = vmatpush.bf16.msra.mxu0 0
        %1336 = vmatpush.bf16.msra.mxu0 0
        %1337 = vmatpush.bf16.msra.mxu0 %v1328
        %1338 = vmatmul.bf16.gmra.mxu0 %v1325
        %v1339 = vpop.f32.mrf.mxu0
        %v1340 = vadd.f32 %v1321, %v1339
        %v1341 = vpop.f32.mrf.mxu0
        %1342 = vdwg.mxu0
        %s1343 = scalar_lea.vmem %s5, 8
        %v1344 = vld [vmem:[%s1343] sm:$0xf]
        %v1346 = vsel %vm932, %v1299, 0
        %v1349 = vsel %vm1307, %v1344, 0
        %1351 = vmatpush.bf16.msra.mxu0 0
        %1352 = vmatpush.bf16.msra.mxu0 0
        %1353 = vmatpush.bf16.msra.mxu0 0
        %1354 = vmatpush.bf16.msra.mxu0 0
        %1355 = vmatpush.bf16.msra.mxu0 0
        %1356 = vmatpush.bf16.msra.mxu0 0
        %1357 = vmatpush.bf16.msra.mxu0 0
        %1358 = vmatpush.bf16.msra.mxu0 %v1349
        %1359 = vmatmul.bf16.gmra.mxu0 %v1346
        %v1360 = vpop.f32.mrf.mxu0
        %v1361 = vadd.f32 0.0, %v1360
        %v1362 = vpop.f32.mrf.mxu0
        %1363 = vdwg.mxu0
        %v1364 = vadd.f32 %v1340, %v1361
        %s1365 = scalar_lea.vmem %s5, 12
        %v1366 = vld [vmem:[%s1365] sm:$0xf]
        %v1368 = vsel %vm932, %v1300, 0
        %v1371 = vsel %vm1307, %v1366, 0
        %1373 = vmatpush.bf16.msra.mxu0 0
        %1374 = vmatpush.bf16.msra.mxu0 0
        %1375 = vmatpush.bf16.msra.mxu0 0
        %1376 = vmatpush.bf16.msra.mxu0 0
        %1377 = vmatpush.bf16.msra.mxu0 0
        %1378 = vmatpush.bf16.msra.mxu0 0
        %1379 = vmatpush.bf16.msra.mxu0 0
        %1380 = vmatpush.bf16.msra.mxu0 %v1371
        %1381 = vmatmul.bf16.gmra.mxu0 %v1368
        %v1382 = vpop.f32.mrf.mxu0
        %v1383 = vadd.f32 0.0, %v1382
        %v1384 = vpop.f32.mrf.mxu0
        %1385 = vdwg.mxu0
        %v1386 = vadd.f32 %v1364, %v1383
        %v1387 = vadd.f32 %v778, %v1386
        %v1388 = vld [vmem:[%s10] sm:$0x1]
        %v1389 = vld [vmem:[%s11] sm:$0x1]
        %v1390 = vsel %vm796, %v1387, 0.0
        %1391 = vadd.xlane.f32.xlu0 %v1390
        %v1392 = vpop.xlane.xlu0 %1391
        %v1393 = vrcp.pop 32.0
        %v1394 = vmul.f32 32.0, %v1393
        %v1395 = vsub.f32 1.0, %v1394
        %v1396 = vmul.f32 %v1393, %v1395
        %v1397 = vadd.f32 %v1393, %v1396
        %vm1398 = vweird.f32 %v1393
        %v1399 = vsel %vm1398, %v1393, %v1397
        %v1400 = vmul.f32 %v1392, %v1399
        %v1401 = vsub.f32 %v1387, %v1400
        %v1402 = vmul.f32 %v1401, %v1401
        %v1403 = vsel %vm796, %v1402, 0.0
        %1404 = vadd.xlane.f32.xlu0 %v1403
        %v1405 = vpop.xlane.xlu0 %1404
        %v1406 = vmul.f32 %v1405, %v1399
        %v1407 = vadd.f32 %v1406, 1e-05
        %v1408 = vrsqrt.pop %v1407
        %v1409 = vmul.f32 %v1408, %v1407
        %v1410 = vmul.f32 %v1409, %v1408
        %v1411 = vmul.f32 0.5, %v1410
        %v1412 = vsub.f32 1.5, %v1411
        %v1413 = vmul.f32 %v1408, %v1412
        %vm1414 = vweird.f32 %v1407
        %vm1415 = vweird.f32 %v1408
        %vm1416 = vmor %vm1414, %vm1415
        %v1417 = vsel %vm1416, %v1408, %v1413
        %v1418 = vmul.f32 %v1401, %v1417
        %v1420 = vperm.slane %v1388, 0
        %v1422 = vmul.f32 %v1418, %v1420
        %v1424 = vperm.slane %v1389, 0
        %v1426 = vadd.f32 %v1422, %v1424
        %v1427 = vpack.c.bf16 %v1426, %v1426
        %v1428 = vld [vmem:[%s6] sm:$0xf]
        %v1429 = vld [vmem:[%s6 + $0x4] sm:$0xf]
        %v1430 = vld [vmem:[%s6 + $0x8] sm:$0xf]
        %v1431 = vld [vmem:[%s6 + $0xc] sm:$0xf]
        %v1432 = vld [vmem:[%s7] sm:$0x1]
        %v1434 = vperm.slane %v1432, 0
        %v1440 = vunpack.c.l.b16 %v1428
        %v1441 = vunpack.c.l.b16 %v1429
        %v1442 = vunpack.c.l.b16 %v1430
        %v1443 = vunpack.c.l.b16 %v1431
        %v1444 = vpack.c.b16 %v1441, %v1440
        %v1445 = vpack.c.b16 %v1443, %v1442
        %v1449 = vsel %vm796, %v1427, 0
        %1451 = vmatpush.bf16.msra.mxu0 0
        %1452 = vmatpush.bf16.msra.mxu0 0
        %1453 = vmatpush.bf16.msra.mxu0 0
        %1454 = vmatpush.bf16.msra.mxu0 0
        %1455 = vmatpush.bf16.msra.mxu0 0
        %1456 = vmatpush.bf16.msra.mxu0 0
        %1457 = vmatpush.bf16.msra.mxu0 %v1445
        %1458 = vmatpush.bf16.msra.mxu0 %v1444
        %1459 = vmatmul.bf16.gmra.mxu0 %v1449
        %v1460 = vpop.f32.mrf.mxu0
        %v1461 = vadd.f32 %v1434, %v1460
        %v1462 = vpop.f32.mrf.mxu0
        %1463 = vdwg.mxu0
        %v1464 = vmul.f32 %v1461, 0.5
        %v1465 = vmul.f32 %v1461, 0.70710677
        %v1466 = vmul.f32 %v1465, %v1465
        %v1467 = vmin.f32 16.0, %v1466
        %v1468 = vmul.f32 %v1467, 2.1237322e-06
        %v1469 = vadd.f32 %v1468, 0.00028619796
        %v1470 = vmul.f32 %v1467, %v1469
        %v1471 = vadd.f32 %v1470, 0.0036580483
        %v1472 = vmul.f32 %v1467, %v1471
        %v1473 = vadd.f32 %v1472, 0.05243302
        %v1474 = vmul.f32 %v1467, %v1473
        %v1475 = vadd.f32 %v1474, 0.18741608
        %v1476 = vmul.f32 %v1467, %v1475
        %v1477 = vadd.f32 %v1476, 1.1283791
        %v1478 = vmul.f32 %v1465, %v1477
        %v1479 = vmul.f32 %v1467, 3.8918573e-05
        %v1480 = vadd.f32 %v1479, 0.001143296
        %v1481 = vmul.f32 %v1467, %v1480
        %v1482 = vadd.f32 %v1481, 0.014752088
        %v1483 = vmul.f32 %v1467, %v1482
        %v1484 = vadd.f32 %v1483, 0.112945676
        %v1485 = vmul.f32 %v1467, %v1484
        %v1486 = vadd.f32 %v1485, 0.4994258
        %v1487 = vmul.f32 %v1467, %v1486
        %v1488 = vadd.f32 %v1487, 1.0
        %v1489 = vrcp.pop %v1488
        %v1490 = vmul.f32 %v1488, %v1489
        %v1491 = vsub.f32 1.0, %v1490
        %v1492 = vmul.f32 %v1489, %v1491
        %v1493 = vadd.f32 %v1489, %v1492
        %vm1494 = vweird.f32 %v1488
        %vm1495 = vweird.f32 %v1489
        %vm1496 = vmor %vm1494, %vm1495
        %v1497 = vsel %vm1496, %v1489, %v1493
        %v1498 = vand.u32 2147483647, %v1488
        %vm1499 = vcmp.eq.f32.partialorder %v1498, 8.507059e+37
        %v1500 = vand.u32 %v1488, 2147483648
        %v1501 = vor.u32 1.1754944e-38, %v1500
        %v1502 = vsel %vm1499, %v1501, %v1497
        %v1503 = vmul.f32 %v1478, %v1502
        %v1504 = vmin.f32 %v1503, 1.0
        %v1505 = vmax.f32 %v1504, -1.0
        %v1506 = vadd.f32 %v1505, 1.0
        %v1507 = vmul.f32 %v1464, %v1506
        %v1508 = vpack.c.bf16 %v1507, %v1507
        %v1509 = vld [vmem:[%s8] sm:$0xf]
        %v1510 = vld [vmem:[%s8 + $0x4] sm:$0xf]
        %v1511 = vld [vmem:[%s8 + $0x8] sm:$0xf]
        %v1512 = vld [vmem:[%s8 + $0xc] sm:$0xf]
        %v1513 = vld [vmem:[%s8 + $0x10] sm:$0xf]
        %v1514 = vld [vmem:[%s8 + $0x14] sm:$0xf]
        %v1515 = vld [vmem:[%s8 + $0x18] sm:$0xf]
        %v1516 = vld [vmem:[%s8 + $0x1c] sm:$0xf]
        %v1517 = vld [vmem:[%s8 + $0x20] sm:$0xf]
        %v1518 = vld [vmem:[%s8 + $0x24] sm:$0xf]
        %v1519 = vld [vmem:[%s8 + $0x28] sm:$0xf]
        %v1520 = vld [vmem:[%s8 + $0x2c] sm:$0xf]
        %v1521 = vld [vmem:[%s8 + $0x30] sm:$0xf]
        %v1522 = vld [vmem:[%s8 + $0x34] sm:$0xf]
        %v1523 = vld [vmem:[%s8 + $0x38] sm:$0xf]
        %v1524 = vld [vmem:[%s8 + $0x3c] sm:$0xf]
        %v1525 = vld [vmem:[%s9] sm:$0x1]
        %v1527 = vperm.slane %v1525, 0
        %v1545 = vunpack.c.l.b16 %v1509
        %v1546 = vunpack.c.l.b16 %v1510
        %v1547 = vunpack.c.l.b16 %v1511
        %v1548 = vunpack.c.l.b16 %v1512
        %v1549 = vunpack.c.l.b16 %v1513
        %v1550 = vunpack.c.l.b16 %v1514
        %v1551 = vunpack.c.l.b16 %v1515
        %v1552 = vunpack.c.l.b16 %v1516
        %v1553 = vunpack.c.l.b16 %v1517
        %v1554 = vunpack.c.l.b16 %v1518
        %v1555 = vunpack.c.l.b16 %v1519
        %v1556 = vunpack.c.l.b16 %v1520
        %v1557 = vunpack.c.l.b16 %v1521
        %v1558 = vunpack.c.l.b16 %v1522
        %v1559 = vunpack.c.l.b16 %v1523
        %v1560 = vunpack.c.l.b16 %v1524
        %v1561 = vpack.c.b16 %v1546, %v1545
        %v1562 = vpack.c.b16 %v1548, %v1547
        %v1563 = vpack.c.b16 %v1550, %v1549
        %v1564 = vpack.c.b16 %v1552, %v1551
        %v1565 = vpack.c.b16 %v1554, %v1553
        %v1566 = vpack.c.b16 %v1556, %v1555
        %v1567 = vpack.c.b16 %v1558, %v1557
        %v1568 = vpack.c.b16 %v1560, %v1559
        %1577 = vmatpush.bf16.msra.mxu0 %v1568
        %1578 = vmatpush.bf16.msra.mxu0 %v1567
        %1579 = vmatpush.bf16.msra.mxu0 %v1566
        %1580 = vmatpush.bf16.msra.mxu0 %v1565
        %1581 = vmatpush.bf16.msra.mxu0 %v1564
        %1582 = vmatpush.bf16.msra.mxu0 %v1563
        %1583 = vmatpush.bf16.msra.mxu0 %v1562
        %1584 = vmatpush.bf16.msra.mxu0 %v1561
        %1585 = vmatmul.bf16.gmra.mxu0 %v1508
        %v1586 = vpop.f32.mrf.mxu0
        %v1587 = vadd.f32 %v1527, %v1586
        %v1588 = vpop.f32.mrf.mxu0
        %1589 = vdwg.mxu0
        %v1590 = vadd.f32 %v1426, %v1587
        %v1591 = vld [vmem:[%s12] sm:$0x1]
        %v1592 = vld [vmem:[%s13] sm:$0x1]
        %v1593 = vsel %vm796, %v1590, 0.0
        %1594 = vadd.xlane.f32.xlu0 %v1593
        %v1595 = vpop.xlane.xlu0 %1594
        %v1596 = vmul.f32 %v1595, %v1399
        %v1597 = vsub.f32 %v1590, %v1596
        %v1598 = vmul.f32 %v1597, %v1597
        %v1599 = vsel %vm796, %v1598, 0.0
        %1600 = vadd.xlane.f32.xlu0 %v1599
        %v1601 = vpop.xlane.xlu0 %1600
        %v1602 = vmul.f32 %v1601, %v1399
        %v1603 = vadd.f32 %v1602, 1e-05
        %v1604 = vrsqrt.pop %v1603
        %v1605 = vmul.f32 %v1604, %v1603
        %v1606 = vmul.f32 %v1605, %v1604
        %v1607 = vmul.f32 0.5, %v1606
        %v1608 = vsub.f32 1.5, %v1607
        %v1609 = vmul.f32 %v1604, %v1608
        %vm1610 = vweird.f32 %v1603
        %vm1611 = vweird.f32 %v1604
        %vm1612 = vmor %vm1610, %vm1611
        %v1613 = vsel %vm1612, %v1604, %v1609
        %v1614 = vmul.f32 %v1597, %v1613
        %v1616 = vperm.slane %v1591, 0
        %v1618 = vmul.f32 %v1614, %v1616
        %v1620 = vperm.slane %v1592, 0
        %v1622 = vadd.f32 %v1618, %v1620
        %1623 = vst.msk [vmem:[%s493] sm:$0xff] %vm796, %v1622
        %s1624 = sand.u32 %s356, 1
        %s1625 = scalar_lea.sflag [#allocation9], %s1624
        %s1626 = sand.u32 %s356, 1
        %s1627 = smul.addr %s1626, 8
        %s1628 = scalar_lea.vmem [#allocation8], %s1627
        // Predicated region
        $region88: #{tpu_custom_call.1} parent=75 // pred_check
          %p1629 = pneg %p366
        $region89: #{tpu_custom_call.1} parent=75 // pred_check_branch
          %1631 = sbr.rel (%p1629) target = $region91
        $region90: #{tpu_custom_call.1} parent=75 // pred_region
          %1633 = vsyncadd %s1625, 0
          %s1634 = sadd.s32 %s33, %s32
          %s1635 = smul.addr %s1634, 8
          %s1636 = scalar_lea.hbm %s14, %s1635
          %s1638 = sshll.u32 %s1628, 4
          %s1639 = int_to_ptr.vmem [resolvable:$true] %s1638
          %s1640 = sshll.u32 %s1636, 4
          %s1641 = int_to_ptr.hbm [resolvable:$true] %s1640
          %1643 = dma.vmem_to_hbm [thread:$0]  %s1639, 128, %s1641, %s1625
        $region91: #{tpu_custom_call.1} parent=75 // pred_fallthru
          _
      $region76: #{tpu_custom_call.1} parent=5 // pred_fallthru
        _
      %p1644 = scmp.le.s32.totalorder 2, %s23
      // Predicated region
      $region92: #{tpu_custom_call.1} parent=5 // pred_check
        %p1645 = pneg %p1644
      $region93: #{tpu_custom_call.1} parent=5 // pred_check_branch
        %1647 = sbr.rel (%p1645) target = $region95
      $region94: #{tpu_custom_call.1} parent=5 // pred_region
        %s1648 = ssub.s32 %s23, 2
        // Predicated region
        $region96: #{tpu_custom_call.1} parent=94 // pred_check
          %p1649 = pneg %p372
        $region97: #{tpu_custom_call.1} parent=94 // pred_check_branch
          %1651 = sbr.rel (%p1649) target = $region99
        $region98: #{tpu_custom_call.1} parent=94 // pred_region
          %s1652 = sand.u32 %s357, 1
          %s1653 = scalar_lea.sflag [#allocation9], %s1652
          %s1654 = sand.u32 %s357, 1
          %s1655 = smul.addr %s1654, 8
          %s1656 = scalar_lea.vmem [#allocation8], %s1655
          %1658 = dma.done %s1653, 128
        $region99: #{tpu_custom_call.1} parent=94 // pred_fallthru
          _
      $region95: #{tpu_custom_call.1} parent=5 // pred_fallthru
        _
    $region6: #{tpu_custom_call.1} parent=1 // loop_footer
      %s27 = sadd.s32 1, %s23
    $region7: #{tpu_custom_call.1} parent=1 // loop_footer_branch
      %22 = sbr.rel target = $region3
    $region8: #{tpu_custom_call.1} parent=1 // loop_exit
      _
    %1659 = vsyncpa [#allocation9], 1
    %s1660 = scalar_lea.sflag [#allocation9], 1
    %1661 = vsyncpa %s1660, 1

</llo_original>
